<compile_context>
chip_gen: v7x
topology: tpu7x:2x2x1
jax: 0.10.0
libtpu: 0.0.40
codegen_flags: <defaults>
</compile_context>

<pallas_src>
import functools

import numpy as np
import jax
import jax.numpy as jnp
from jax import lax
from jax.experimental import pallas as pl
from jax.experimental.pallas import tpu as pltpu


# ----------------------------- kernel helpers --------------------------------
def _layer_norm(x, g, b, eps=1e-6):
    mu = jnp.mean(x, axis=-1, keepdims=True)
    var = jnp.mean(jnp.square(x - mu), axis=-1, keepdims=True)
    return (x - mu) * lax.rsqrt(var + eps) * g + b


def fused_encoder_kernel(num_heads, block_b,
                         lens_ref,                          # scalar prefetch (SMEM)
                         x_ref, pe_ref,
                         g1_ref, b1_ref, wqkv_ref, wo_ref,
                         g2_ref, b2_ref, w1_ref, w2_ref,
                         og_ref, ob_ref,
                         out_ref,
                         xs_ref):                           # VMEM scratch: residual (N, D)
    b = pl.program_id(0)
    l = pl.program_id(1)
    Bb = block_b
    N, D = xs_ref.shape                                     # N = Bb * T
    T = N // Bb
    H = num_heads
    dh = D // H

    # per-sequence lengths for this batch block (cheap SMEM scalar reads)
    lens = [lens_ref[b * Bb + i] for i in range(Bb)]

    # ---- layer 0: input prep (length mask * x + scaled PE) -> VMEM residual ----
    @pl.when(l == 0)
    def _():
        pos_row = lax.broadcasted_iota(jnp.int32, (T, 1), 0)
        pe = pe_ref[...]
        for i in range(Bb):                                 # static, tiny
            row_mask = (pos_row < lens[i]).astype(jnp.float32)
            xs_ref[i * T:(i + 1) * T, :] = x_ref[i] * row_mask + pe

    # additive key-mask bias (Bb, 1, T), recomputed per layer (few VPU ops)
    pos_col = lax.broadcasted_iota(jnp.int32, (1, 1, T), 2)
    key_bias = jnp.concatenate(
        [(pos_col >= lens[i]).astype(jnp.float32) * jnp.float32(-1e9)
         for i in range(Bb)], axis=0)                       # (Bb, 1, T)

    x = xs_ref[...]                                         # (N, D) f32 residual

    # ---- pre-LN multi-head self attention (dropout == identity, eval) ----
    h = _layer_norm(x, g1_ref[0], b1_ref[0]).astype(jnp.bfloat16)
    # one lane-dense QKV matmul; 1/sqrt(dh) scale is folded into the Q weights
    qkv = jnp.dot(h, wqkv_ref[0], preferred_element_type=jnp.float32)   # (N, 3D)
    qkv = qkv.reshape(Bb, T, 3 * D).astype(jnp.bfloat16)

    ctx_heads = []
    for hh in range(H):                                     # small static unroll
        qh = qkv[:, :, hh * dh:(hh + 1) * dh]               # (Bb, T, dh)
        kh = qkv[:, :, D + hh * dh:D + (hh + 1) * dh]
        vh = qkv[:, :, 2 * D + hh * dh:2 * D + (hh + 1) * dh]
        logits = jnp.einsum("bqd,bkd->bqk", qh, kh,
                            preferred_element_type=jnp.float32) + key_bias
        m = jnp.max(logits, axis=-1, keepdims=True)
        p = jnp.exp(logits - m)
        s = jnp.maximum(jnp.sum(p, axis=-1, keepdims=True), jnp.float32(1e-30))
        probs = (p * pl.reciprocal(s, approx=True)).astype(jnp.bfloat16)
        ctx_heads.append(jnp.einsum("bqk,bkd->bqd", probs, vh,
                                    preferred_element_type=jnp.float32))
    # concat heads on the lane axis -> single fused wo matmul with K = D
    ctx = jnp.concatenate(ctx_heads, axis=-1).reshape(N, D).astype(jnp.bfloat16)
    x = x + jnp.dot(ctx, wo_ref[0], preferred_element_type=jnp.float32)

    # ---- pre-LN feed-forward (Linear -> ReLU -> Linear, no bias) ----
    h2 = _layer_norm(x, g2_ref[0], b2_ref[0]).astype(jnp.bfloat16)
    ff = jnp.maximum(jnp.dot(h2, w1_ref[0], preferred_element_type=jnp.float32),
                     0.0)
    x = x + jnp.dot(ff.astype(jnp.bfloat16), w2_ref[0],
                    preferred_element_type=jnp.float32)

    xs_ref[...] = x

    # ---- final output LayerNorm after the last layer ----
    @pl.when(l == pl.num_programs(1) - 1)
    def _():
        out_ref[...] = _layer_norm(x, og_ref[...], ob_ref[...]
                                   ).reshape(Bb, T, D).astype(out_ref.dtype)


# ----------------------------- pallas wrapper --------------------------------
def _pick_block_b(B, T):
    """Largest divisor of B whose flattened row count stays modest."""
    target_rows = 256
    bb = 1
    for cand in range(1, B + 1):
        if B % cand == 0 and cand * T <= max(target_rows, T):
            bb = cand
    return bb


def transformer_encoder(inputs, input_lengths, params, out_ln, pe_scale,
                        num_heads, block_b=None):
    """Equivalent of TransformerEncoder.forward (eval mode; dropout = identity)."""
    B, T, D = inputs.shape
    L = params["wqkv"].shape[0]
    FF = params["w1"].shape[-1]
    Bb = _pick_block_b(B, T) if block_b is None else block_b
    assert B % Bb == 0

    pe_scaled = (sinusoid_encoding_table(T, D) * pe_scale).astype(jnp.float32)

    def const(shape):
        return pl.BlockSpec(shape, lambda b, l, lens: (0,) * len(shape))

    def per_layer(shape):
        return pl.BlockSpec(shape,
                            lambda b, l, lens: (l,) + (0,) * (len(shape) - 1))

    grid_spec = pltpu.PrefetchScalarGridSpec(
        num_scalar_prefetch=1,
        grid=(B // Bb, L),
        in_specs=[
            pl.BlockSpec((Bb, T, D), lambda b, l, lens: (b, 0, 0)),  # x
            const((T, D)),                                           # scaled PE
            per_layer((1, 1, D)), per_layer((1, 1, D)),              # attn LN g/b
            per_layer((1, D, 3 * D)),                                # fused Wqkv
            per_layer((1, D, D)),                                    # Wo
            per_layer((1, 1, D)), per_layer((1, 1, D)),              # ffn LN g/b
            # (v6e: consider pipeline_mode=pl.Buffered(3) on the two FFN specs)
            per_layer((1, D, FF)), per_layer((1, FF, D)),            # ffn w1 w2
            const((1, D)), const((1, D)),                            # out LN g/b
        ],
        out_specs=pl.BlockSpec((Bb, T, D), lambda b, l, lens: (b, 0, 0)),
        scratch_shapes=[pltpu.VMEM((Bb * T, D), jnp.float32)],
    )

    # explicit scoped-VMEM budget: double-buffered per-layer weights + blocks
    w_layer_bytes = 2 * (D * 3 * D + D * D + D * FF + FF * D)        # bf16
    act_bytes = 2 * 2 * (Bb * T * D) * 4                             # x/out, dbl-buf, f32
    scratch_bytes = (Bb * T * D) * 4 + (T * D) * 4
    vmem_limit = int(min(64 * 1024 * 1024,
                         max(16 * 1024 * 1024,
                             2 * w_layer_bytes + act_bytes + scratch_bytes
                             + (4 << 20))))

    return pl.pallas_call(
        functools.partial(fused_encoder_kernel, num_heads, Bb),
        out_shape=jax.ShapeDtypeStruct((B, T, D), jnp.float32),
        grid_spec=grid_spec,
        compiler_params=pltpu.CompilerParams(
            dimension_semantics=("parallel", "arbitrary"),
            vmem_limit_bytes=vmem_limit),
    )(input_lengths, inputs, pe_scaled,
      params["ln1_g"], params["ln1_b"], params["wqkv"], params["wo"],
      params["ln2_g"], params["ln2_b"], params["w1"], params["w2"],
      out_ln["g"], out_ln["b"])


# ----------------------------- model glue --------------------------------
def sinusoid_encoding_table(length, channels):
    pos = np.arange(length, dtype=np.float64)[:, None]
    i = np.arange(channels)[None, :]
    angle = pos / np.power(10000.0, 2.0 * (i // 2) / channels)
    tab = np.zeros((length, channels), dtype=np.float64)
    tab[:, 0::2] = np.sin(angle[:, 0::2])
    tab[:, 1::2] = np.cos(angle[:, 1::2])
    return jnp.asarray(tab, dtype=jnp.float32)


def init_params(key, n_layers, d_model, n_heads, d_ff):
    # TODO(synk): assumes input_size == encoder_hidden (as in the test config)
    # so all layers share weight shapes and can be stacked along a leading L axis.
    dh = d_model // n_heads
    scale = dh ** -0.5
    L = n_layers
    keys = jax.random.split(key, 6 * L)

    def rnd(i, shape):
        return 0.05 * jax.random.normal(keys[i], shape, jnp.float32)

    wqkv, wo, w1, w2 = [], [], [], []
    for l in range(L):
        wq = rnd(6 * l + 0, (d_model, d_model)) * scale   # 1/sqrt(dh) folded here
        wk = rnd(6 * l + 1, (d_model, d_model))
        wv = rnd(6 * l + 2, (d_model, d_model))
        wqkv.append(jnp.concatenate([wq, wk, wv], axis=-1).astype(jnp.bfloat16))
        wo.append(rnd(6 * l + 3, (d_model, d_model)).astype(jnp.bfloat16))
        w1.append(rnd(6 * l + 4, (d_model, d_ff)).astype(jnp.bfloat16))
        w2.append(rnd(6 * l + 5, (d_ff, d_model)).astype(jnp.bfloat16))

    params = {
        "ln1_g": jnp.ones((L, 1, d_model), jnp.float32),
        "ln1_b": jnp.zeros((L, 1, d_model), jnp.float32),
        "ln2_g": jnp.ones((L, 1, d_model), jnp.float32),
        "ln2_b": jnp.zeros((L, 1, d_model), jnp.float32),
        "wqkv": jnp.stack(wqkv), "wo": jnp.stack(wo),
        "w1": jnp.stack(w1), "w2": jnp.stack(w2),
    }
    out_ln = {"g": jnp.ones((1, d_model), jnp.float32),
              "b": jnp.zeros((1, d_model), jnp.float32)}
    pe_scale = jnp.float32(1.0)
    return params, out_ln, pe_scale


# ----------------------------- pure-JAX reference --------------------------------
def reference_encoder(inputs, input_lengths, params, out_ln, pe_scale, num_heads):
    """Pure-JAX mirror of the kernel (same bf16-matmul / f32-accumulate math)."""
    B, T, D = inputs.shape
    L = params["wqkv"].shape[0]
    H = num_heads
    dh = D // H
    mask = (jnp.arange(T)[None, :] < input_lengths[:, None]).astype(jnp.float32)
    x = inputs * mask[..., None] + sinusoid_encoding_table(T, D)[None] * pe_scale
    bias = ((1.0 - mask) * -1e9)[:, None, None, :]          # (B,1,1,T)
    for l in range(L):
        h = _layer_norm(x, params["ln1_g"][l, 0], params["ln1_b"][l, 0]
                        ).astype(jnp.bfloat16)
        qkv = jnp.einsum("btd,de->bte", h, params["wqkv"][l],
                         preferred_element_type=jnp.float32).astype(jnp.bfloat16)
        q = qkv[..., :D].reshape(B, T, H, dh)
        k = qkv[..., D:2 * D].reshape(B, T, H, dh)
        v = qkv[..., 2 * D:].reshape(B, T, H, dh)
        logits = jnp.einsum("bqhd,bkhd->bhqk", q, k,
                            preferred_element_type=jnp.float32) + bias
        probs = jax.nn.softmax(logits, axis=-1).astype(jnp.bfloat16)
        ctx = jnp.einsum("bhqk,bkhd->bqhd", probs, v,
                         preferred_element_type=jnp.float32)
        ctx = ctx.reshape(B, T, D).astype(jnp.bfloat16)
        x = x + jnp.einsum("btd,de->bte", ctx, params["wo"][l],
                           preferred_element_type=jnp.float32)
        h2 = _layer_norm(x, params["ln2_g"][l, 0], params["ln2_b"][l, 0]
                         ).astype(jnp.bfloat16)
        ff = jnp.maximum(jnp.einsum("btd,df->btf", h2, params["w1"][l],
                                    preferred_element_type=jnp.float32), 0.0)
        x = x + jnp.einsum("btf,fd->btd", ff.astype(jnp.bfloat16), params["w2"][l],
                           preferred_element_type=jnp.float32)
    return _layer_norm(x, out_ln["g"], out_ln["b"])


# ----------------------------- main --------------------------------
if __name__ == "__main__":
    B, T, D = 2, 8, 32          # batch, seq, model width (input_size == encoder_hidden)
    NUM_HEADS = 4
    N_LAYERS = 2
    D_FF = 4 * D

    key = jax.random.PRNGKey(0)
    k_in, k_par = jax.random.split(key)
    inputs = jax.random.normal(k_in, (B, T, D), jnp.float32)
    input_lengths = jnp.array([8, 5], jnp.int32)

    params, out_ln, pe_scale = init_params(k_par, N_LAYERS, D, NUM_HEADS, D_FF)

    out = transformer_encoder(inputs, input_lengths, params, out_ln, pe_scale,
                              NUM_HEADS)
    out = jax.block_until_ready(out)

    ref = reference_encoder(inputs, input_lengths, params, out_ln, pe_scale,
                            NUM_HEADS)
    ref = jax.block_until_ready(ref)
    # tolerance covers the approx-reciprocal softmax; matmul math (bf16 in /
    # f32 accumulate) is identical between kernel and reference.
    np.testing.assert_allclose(np.asarray(out), np.asarray(ref),
                               rtol=2e-2, atol=2e-2)

    # TODO(synk): dropout layers are treated as identity (eval-mode forward).
    print("KERNEL_OK")
</pallas_src>

<mosaic_0001>
module attributes {stable_mosaic.version = 11 : i64} {
  func.func @fused_encoder_kernel(%arg0: i32, %arg1: i32, %arg2: memref<2xi32, #tpu.memory_space<smem>>, %arg3: memref<2x8x32xf32, #tpu.memory_space<vmem>>, %arg4: memref<8x32xf32, #tpu.memory_space<vmem>>, %arg5: memref<1x1x32xf32, #tpu.memory_space<vmem>>, %arg6: memref<1x1x32xf32, #tpu.memory_space<vmem>>, %arg7: memref<1x32x96xbf16, #tpu.memory_space<vmem>>, %arg8: memref<1x32x32xbf16, #tpu.memory_space<vmem>>, %arg9: memref<1x1x32xf32, #tpu.memory_space<vmem>>, %arg10: memref<1x1x32xf32, #tpu.memory_space<vmem>>, %arg11: memref<1x32x128xbf16, #tpu.memory_space<vmem>>, %arg12: memref<1x128x32xbf16, #tpu.memory_space<vmem>>, %arg13: memref<1x32xf32, #tpu.memory_space<vmem>>, %arg14: memref<1x32xf32, #tpu.memory_space<vmem>>, %arg15: memref<2x8x32xf32, #tpu.memory_space<vmem>>, %arg16: memref<16x32xf32, #tpu.memory_space<vmem>>) attributes {dimension_semantics = [#tpu.dimension_semantics<parallel>, #tpu.dimension_semantics<arbitrary>], iteration_bounds = array<i64: 1, 2>, scalar_prefetch = 1 : i64, scratch_operands = 1 : i64, tpu.core_type = #tpu.core_type<tc>, window_params = [{transform_indices = @transform_0, window_bounds = array<i64: 2, 8, 32>}, {pipeline_mode = #tpu.pipeline_mode<synchronous>, transform_indices = @transform_1, window_bounds = array<i64: 8, 32>}, {transform_indices = @transform_2, window_bounds = array<i64: 1, 1, 32>}, {transform_indices = @transform_3, window_bounds = array<i64: 1, 1, 32>}, {transform_indices = @transform_4, window_bounds = array<i64: 1, 32, 96>}, {transform_indices = @transform_5, window_bounds = array<i64: 1, 32, 32>}, {transform_indices = @transform_6, window_bounds = array<i64: 1, 1, 32>}, {transform_indices = @transform_7, window_bounds = array<i64: 1, 1, 32>}, {transform_indices = @transform_8, window_bounds = array<i64: 1, 32, 128>}, {transform_indices = @transform_9, window_bounds = array<i64: 1, 128, 32>}, {pipeline_mode = #tpu.pipeline_mode<synchronous>, transform_indices = @transform_10, window_bounds = array<i64: 1, 32>}, {pipeline_mode = #tpu.pipeline_mode<synchronous>, transform_indices = @transform_11, window_bounds = array<i64: 1, 32>}, {transform_indices = @transform_12, window_bounds = array<i64: 2, 8, 32>}]} {
    %c2_i32 = arith.constant 2 : i32
    %0 = arith.muli %arg0, %c2_i32 : i32
    %c0_i32 = arith.constant 0 : i32
    %1 = arith.addi %0, %c0_i32 : i32
    %2 = arith.index_cast %1 : i32 to index
    %3 = memref.load %arg2[%2] : memref<2xi32, #tpu.memory_space<smem>>
    %c2_i32_0 = arith.constant 2 : i32
    %4 = arith.muli %arg0, %c2_i32_0 : i32
    %c1_i32 = arith.constant 1 : i32
    %5 = arith.addi %4, %c1_i32 : i32
    %6 = arith.index_cast %5 : i32 to index
    %7 = memref.load %arg2[%6] : memref<2xi32, #tpu.memory_space<smem>>
    %c0_i32_1 = arith.constant 0 : i32
    %8 = arith.cmpi eq, %arg1, %c0_i32_1 : i32
    %9 = arith.extui %8 : i1 to i32
    %c0_i32_2 = arith.constant 0 : i32
    %10 = arith.cmpi ne, %9, %c0_i32_2 : i32
    scf.if %10 {
      %186 = tpu.iota {dimensions = array<i32: 0>} : vector<8x1xi32>
      %c0_68 = arith.constant 0 : index
      %c0_69 = arith.constant 0 : index
      %187 = vector.load %arg4[%c0_68, %c0_69] : memref<8x32xf32, #tpu.memory_space<vmem>>, vector<8x32xf32>
      %188 = vector.broadcast %3 : i32 to vector<8x1xi32>
      %189 = arith.cmpi slt, %186, %188 : vector<8x1xi32>
      %190 = arith.extui %189 : vector<8x1xi1> to vector<8x1xi32>
      %191 = arith.sitofp %190 : vector<8x1xi32> to vector<8x1xf32>
      %c0_70 = arith.constant 0 : index
      %c0_71 = arith.constant 0 : index
      %c0_72 = arith.constant 0 : index
      %192 = vector.load %arg3[%c0_70, %c0_71, %c0_72] : memref<2x8x32xf32, #tpu.memory_space<vmem>>, vector<1x8x32xf32>
      %193 = vector.shape_cast %192 : vector<1x8x32xf32> to vector<8x32xf32>
      %194 = vector.broadcast %191 : vector<8x1xf32> to vector<8x32xf32>
      %195 = arith.mulf %193, %194 : vector<8x32xf32>
      %196 = arith.addf %195, %187 : vector<8x32xf32>
      %c0_73 = arith.constant 0 : index
      %c0_74 = arith.constant 0 : index
      %197 = vector.load %arg16[%c0_73, %c0_74] : memref<16x32xf32, #tpu.memory_space<vmem>>, vector<8x32xf32>
      tpu.vector_store %arg16[%c0_73, %c0_74], %196 {strides = array<i32>} : memref<16x32xf32, #tpu.memory_space<vmem>>, vector<8x32xf32>,
      %198 = vector.broadcast %7 : i32 to vector<8x1xi32>
      %199 = arith.cmpi slt, %186, %198 : vector<8x1xi32>
      %200 = arith.extui %199 : vector<8x1xi1> to vector<8x1xi32>
      %201 = arith.sitofp %200 : vector<8x1xi32> to vector<8x1xf32>
      %c1 = arith.constant 1 : index
      %c0_75 = arith.constant 0 : index
      %c0_76 = arith.constant 0 : index
      %202 = vector.load %arg3[%c1, %c0_75, %c0_76] : memref<2x8x32xf32, #tpu.memory_space<vmem>>, vector<1x8x32xf32>
      %203 = vector.shape_cast %202 : vector<1x8x32xf32> to vector<8x32xf32>
      %204 = vector.broadcast %201 : vector<8x1xf32> to vector<8x32xf32>
      %205 = arith.mulf %203, %204 : vector<8x32xf32>
      %206 = arith.addf %205, %187 : vector<8x32xf32>
      %c8 = arith.constant 8 : index
      %c0_77 = arith.constant 0 : index
      %207 = vector.load %arg16[%c8, %c0_77] : memref<16x32xf32, #tpu.memory_space<vmem>>, vector<8x32xf32>
      tpu.vector_store %arg16[%c8, %c0_77], %206 {strides = array<i32>} : memref<16x32xf32, #tpu.memory_space<vmem>>, vector<8x32xf32>,
    } else {
    }
    %11 = tpu.iota {dimensions = array<i32: 2>} : vector<1x1x8xi32>
    %12 = vector.broadcast %3 : i32 to vector<1x1x8xi32>
    %13 = arith.cmpi sge, %11, %12 : vector<1x1x8xi32>
    %14 = arith.extui %13 : vector<1x1x8xi1> to vector<1x1x8xi32>
    %15 = arith.sitofp %14 : vector<1x1x8xi32> to vector<1x1x8xf32>
    %cst = arith.constant -1.000000e+09 : f32
    %16 = vector.broadcast %cst : f32 to vector<1x1x8xf32>
    %17 = arith.mulf %15, %16 : vector<1x1x8xf32>
    %18 = vector.broadcast %7 : i32 to vector<1x1x8xi32>
    %19 = arith.cmpi sge, %11, %18 : vector<1x1x8xi32>
    %20 = arith.extui %19 : vector<1x1x8xi1> to vector<1x1x8xi32>
    %21 = arith.sitofp %20 : vector<1x1x8xi32> to vector<1x1x8xf32>
    %cst_3 = arith.constant -1.000000e+09 : f32
    %22 = vector.broadcast %cst_3 : f32 to vector<1x1x8xf32>
    %23 = arith.mulf %21, %22 : vector<1x1x8xf32>
    %24 = tpu.concatenate %17, %23 in 0 : vector<1x1x8xf32>, vector<1x1x8xf32> -> vector<2x1x8xf32>
    %c0 = arith.constant 0 : index
    %c0_4 = arith.constant 0 : index
    %25 = vector.load %arg16[%c0, %c0_4] : memref<16x32xf32, #tpu.memory_space<vmem>>, vector<16x32xf32>
    %c0_5 = arith.constant 0 : index
    %c0_6 = arith.constant 0 : index
    %c0_7 = arith.constant 0 : index
    %26 = vector.load %arg5[%c0_5, %c0_6, %c0_7] : memref<1x1x32xf32, #tpu.memory_space<vmem>>, vector<1x1x32xf32>
    %27 = vector.shape_cast %26 : vector<1x1x32xf32> to vector<1x32xf32>
    %c0_8 = arith.constant 0 : index
    %c0_9 = arith.constant 0 : index
    %c0_10 = arith.constant 0 : index
    %28 = vector.load %arg6[%c0_8, %c0_9, %c0_10] : memref<1x1x32xf32, #tpu.memory_space<vmem>>, vector<1x1x32xf32>
    %29 = vector.shape_cast %28 : vector<1x1x32xf32> to vector<1x32xf32>
    %cst_11 = arith.constant dense<0.000000e+00> : vector<16xf32>
    %30 = vector.multi_reduction <add>, %25, %cst_11 [1] : vector<16x32xf32> to vector<16xf32>
    %31 = vector.shape_cast %30 : vector<16xf32> to vector<16x1xf32>
    %cst_12 = arith.constant 3.200000e+01 : f32
    %32 = vector.broadcast %cst_12 : f32 to vector<16x1xf32>
    %33 = arith.divf %31, %32 : vector<16x1xf32>
    %34 = vector.broadcast %33 : vector<16x1xf32> to vector<16x32xf32>
    %35 = arith.subf %25, %34 : vector<16x32xf32>
    %36 = arith.mulf %35, %35 : vector<16x32xf32>
    %cst_13 = arith.constant dense<0.000000e+00> : vector<16xf32>
    %37 = vector.multi_reduction <add>, %36, %cst_13 [1] : vector<16x32xf32> to vector<16xf32>
    %38 = vector.shape_cast %37 : vector<16xf32> to vector<16x1xf32>
    %cst_14 = arith.constant 3.200000e+01 : f32
    %39 = vector.broadcast %cst_14 : f32 to vector<16x1xf32>
    %40 = arith.divf %38, %39 : vector<16x1xf32>
    %41 = vector.broadcast %33 : vector<16x1xf32> to vector<16x32xf32>
    %42 = arith.subf %25, %41 : vector<16x32xf32>
    %cst_15 = arith.constant 9.99999997E-7 : f32
    %43 = vector.broadcast %cst_15 : f32 to vector<16x1xf32>
    %44 = arith.addf %40, %43 : vector<16x1xf32>
    %45 = math.rsqrt %44 : vector<16x1xf32>
    %46 = vector.broadcast %45 : vector<16x1xf32> to vector<16x32xf32>
    %47 = arith.mulf %42, %46 : vector<16x32xf32>
    %48 = vector.broadcast %27 : vector<1x32xf32> to vector<16x32xf32>
    %49 = arith.mulf %47, %48 : vector<16x32xf32>
    %50 = vector.broadcast %29 : vector<1x32xf32> to vector<16x32xf32>
    %51 = arith.addf %49, %50 : vector<16x32xf32>
    %52 = arith.truncf %51 : vector<16x32xf32> to vector<16x32xbf16>
    %c0_16 = arith.constant 0 : index
    %c0_17 = arith.constant 0 : index
    %c0_18 = arith.constant 0 : index
    %53 = vector.load %arg7[%c0_16, %c0_17, %c0_18] : memref<1x32x96xbf16, #tpu.memory_space<vmem>>, vector<1x32x96xbf16>
    %54 = vector.shape_cast %53 : vector<1x32x96xbf16> to vector<32x96xbf16>
    %cst_19 = arith.constant dense<0.000000e+00> : vector<16x96xf32>
    %55 = tpu.matmul %52, %54, %cst_19 {dimension_numbers = #tpu.dot_dimension_numbers<[1], [0], [0], [1], [0, 0, 1, 1], [], []>} : vector<16x32xbf16>, vector<32x96xbf16>, vector<16x96xf32> -> vector<16x96xf32>
    %56 = vector.shape_cast %55 : vector<16x96xf32> to vector<2x8x96xf32>
    %57 = arith.truncf %56 : vector<2x8x96xf32> to vector<2x8x96xbf16>
    %58 = vector.extract_strided_slice %57 {offsets = [0, 0, 0], sizes = [2, 8, 8], strides = [1, 1, 1]} : vector<2x8x96xbf16> to vector<2x8x8xbf16>
    %59 = vector.extract_strided_slice %57 {offsets = [0, 0, 32], sizes = [2, 8, 8], strides = [1, 1, 1]} : vector<2x8x96xbf16> to vector<2x8x8xbf16>
    %60 = vector.extract_strided_slice %57 {offsets = [0, 0, 64], sizes = [2, 8, 8], strides = [1, 1, 1]} : vector<2x8x96xbf16> to vector<2x8x8xbf16>
    "tpu.trace_start"() <{level = 10 : i32, message = "bqd,bkd->bqk"}> : () -> ()
    %cst_20 = arith.constant dense<0.000000e+00> : vector<2x8x8xf32>
    %61 = tpu.matmul %58, %59, %cst_20 {dimension_numbers = #tpu.dot_dimension_numbers<[2], [2], [1], [1], [0, 0, 0, 1, 1, 1], [0], [0]>} : vector<2x8x8xbf16>, vector<2x8x8xbf16>, vector<2x8x8xf32> -> vector<2x8x8xf32>
    "tpu.trace_stop"() : () -> ()
    %62 = vector.broadcast %24 : vector<2x1x8xf32> to vector<2x8x8xf32>
    %63 = arith.addf %61, %62 : vector<2x8x8xf32>
    %cst_21 = arith.constant dense<0xFF800000> : vector<2x8xf32>
    %64 = vector.multi_reduction <maximumf>, %63, %cst_21 [2] : vector<2x8x8xf32> to vector<2x8xf32>
    %65 = vector.shape_cast %64 : vector<2x8xf32> to vector<2x8x1xf32>
    %66 = vector.broadcast %65 : vector<2x8x1xf32> to vector<2x8x8xf32>
    %67 = arith.subf %63, %66 : vector<2x8x8xf32>
    %68 = math.exp %67 : vector<2x8x8xf32>
    %cst_22 = arith.constant dense<0.000000e+00> : vector<2x8xf32>
    %69 = vector.multi_reduction <add>, %68, %cst_22 [2] : vector<2x8x8xf32> to vector<2x8xf32>
    %70 = vector.shape_cast %69 : vector<2x8xf32> to vector<2x8x1xf32>
    %cst_23 = arith.constant 1.000000e-30 : f32
    %71 = vector.broadcast %cst_23 : f32 to vector<2x8x1xf32>
    %72 = arith.maximumf %70, %71 : vector<2x8x1xf32>
    %73 = tpu.reciprocal %72 {approx = true} : vector<2x8x1xf32> -> vector<2x8x1xf32>
    %74 = vector.broadcast %73 : vector<2x8x1xf32> to vector<2x8x8xf32>
    %75 = arith.mulf %68, %74 : vector<2x8x8xf32>
    %76 = arith.truncf %75 : vector<2x8x8xf32> to vector<2x8x8xbf16>
    "tpu.trace_start"() <{level = 10 : i32, message = "bqk,bkd->bqd"}> : () -> ()
    %cst_24 = arith.constant dense<0.000000e+00> : vector<2x8x8xf32>
    %77 = tpu.matmul %76, %60, %cst_24 {dimension_numbers = #tpu.dot_dimension_numbers<[2], [1], [1], [2], [0, 0, 0, 1, 1, 2], [0], [0]>} : vector<2x8x8xbf16>, vector<2x8x8xbf16>, vector<2x8x8xf32> -> vector<2x8x8xf32>
    "tpu.trace_stop"() : () -> ()
    %78 = vector.extract_strided_slice %57 {offsets = [0, 0, 8], sizes = [2, 8, 8], strides = [1, 1, 1]} : vector<2x8x96xbf16> to vector<2x8x8xbf16>
    %79 = vector.extract_strided_slice %57 {offsets = [0, 0, 40], sizes = [2, 8, 8], strides = [1, 1, 1]} : vector<2x8x96xbf16> to vector<2x8x8xbf16>
    %80 = vector.extract_strided_slice %57 {offsets = [0, 0, 72], sizes = [2, 8, 8], strides = [1, 1, 1]} : vector<2x8x96xbf16> to vector<2x8x8xbf16>
    "tpu.trace_start"() <{level = 10 : i32, message = "bqd,bkd->bqk"}> : () -> ()
    %cst_25 = arith.constant dense<0.000000e+00> : vector<2x8x8xf32>
    %81 = tpu.matmul %78, %79, %cst_25 {dimension_numbers = #tpu.dot_dimension_numbers<[2], [2], [1], [1], [0, 0, 0, 1, 1, 1], [0], [0]>} : vector<2x8x8xbf16>, vector<2x8x8xbf16>, vector<2x8x8xf32> -> vector<2x8x8xf32>
    "tpu.trace_stop"() : () -> ()
    %82 = vector.broadcast %24 : vector<2x1x8xf32> to vector<2x8x8xf32>
    %83 = arith.addf %81, %82 : vector<2x8x8xf32>
    %cst_26 = arith.constant dense<0xFF800000> : vector<2x8xf32>
    %84 = vector.multi_reduction <maximumf>, %83, %cst_26 [2] : vector<2x8x8xf32> to vector<2x8xf32>
    %85 = vector.shape_cast %84 : vector<2x8xf32> to vector<2x8x1xf32>
    %86 = vector.broadcast %85 : vector<2x8x1xf32> to vector<2x8x8xf32>
    %87 = arith.subf %83, %86 : vector<2x8x8xf32>
    %88 = math.exp %87 : vector<2x8x8xf32>
    %cst_27 = arith.constant dense<0.000000e+00> : vector<2x8xf32>
    %89 = vector.multi_reduction <add>, %88, %cst_27 [2] : vector<2x8x8xf32> to vector<2x8xf32>
    %90 = vector.shape_cast %89 : vector<2x8xf32> to vector<2x8x1xf32>
    %cst_28 = arith.constant 1.000000e-30 : f32
    %91 = vector.broadcast %cst_28 : f32 to vector<2x8x1xf32>
    %92 = arith.maximumf %90, %91 : vector<2x8x1xf32>
    %93 = tpu.reciprocal %92 {approx = true} : vector<2x8x1xf32> -> vector<2x8x1xf32>
    %94 = vector.broadcast %93 : vector<2x8x1xf32> to vector<2x8x8xf32>
    %95 = arith.mulf %88, %94 : vector<2x8x8xf32>
    %96 = arith.truncf %95 : vector<2x8x8xf32> to vector<2x8x8xbf16>
    "tpu.trace_start"() <{level = 10 : i32, message = "bqk,bkd->bqd"}> : () -> ()
    %cst_29 = arith.constant dense<0.000000e+00> : vector<2x8x8xf32>
    %97 = tpu.matmul %96, %80, %cst_29 {dimension_numbers = #tpu.dot_dimension_numbers<[2], [1], [1], [2], [0, 0, 0, 1, 1, 2], [0], [0]>} : vector<2x8x8xbf16>, vector<2x8x8xbf16>, vector<2x8x8xf32> -> vector<2x8x8xf32>
    "tpu.trace_stop"() : () -> ()
    %98 = vector.extract_strided_slice %57 {offsets = [0, 0, 16], sizes = [2, 8, 8], strides = [1, 1, 1]} : vector<2x8x96xbf16> to vector<2x8x8xbf16>
    %99 = vector.extract_strided_slice %57 {offsets = [0, 0, 48], sizes = [2, 8, 8], strides = [1, 1, 1]} : vector<2x8x96xbf16> to vector<2x8x8xbf16>
    %100 = vector.extract_strided_slice %57 {offsets = [0, 0, 80], sizes = [2, 8, 8], strides = [1, 1, 1]} : vector<2x8x96xbf16> to vector<2x8x8xbf16>
    "tpu.trace_start"() <{level = 10 : i32, message = "bqd,bkd->bqk"}> : () -> ()
    %cst_30 = arith.constant dense<0.000000e+00> : vector<2x8x8xf32>
    %101 = tpu.matmul %98, %99, %cst_30 {dimension_numbers = #tpu.dot_dimension_numbers<[2], [2], [1], [1], [0, 0, 0, 1, 1, 1], [0], [0]>} : vector<2x8x8xbf16>, vector<2x8x8xbf16>, vector<2x8x8xf32> -> vector<2x8x8xf32>
    "tpu.trace_stop"() : () -> ()
    %102 = vector.broadcast %24 : vector<2x1x8xf32> to vector<2x8x8xf32>
    %103 = arith.addf %101, %102 : vector<2x8x8xf32>
    %cst_31 = arith.constant dense<0xFF800000> : vector<2x8xf32>
    %104 = vector.multi_reduction <maximumf>, %103, %cst_31 [2] : vector<2x8x8xf32> to vector<2x8xf32>
    %105 = vector.shape_cast %104 : vector<2x8xf32> to vector<2x8x1xf32>
    %106 = vector.broadcast %105 : vector<2x8x1xf32> to vector<2x8x8xf32>
    %107 = arith.subf %103, %106 : vector<2x8x8xf32>
    %108 = math.exp %107 : vector<2x8x8xf32>
    %cst_32 = arith.constant dense<0.000000e+00> : vector<2x8xf32>
    %109 = vector.multi_reduction <add>, %108, %cst_32 [2] : vector<2x8x8xf32> to vector<2x8xf32>
    %110 = vector.shape_cast %109 : vector<2x8xf32> to vector<2x8x1xf32>
    %cst_33 = arith.constant 1.000000e-30 : f32
    %111 = vector.broadcast %cst_33 : f32 to vector<2x8x1xf32>
    %112 = arith.maximumf %110, %111 : vector<2x8x1xf32>
    %113 = tpu.reciprocal %112 {approx = true} : vector<2x8x1xf32> -> vector<2x8x1xf32>
    %114 = vector.broadcast %113 : vector<2x8x1xf32> to vector<2x8x8xf32>
    %115 = arith.mulf %108, %114 : vector<2x8x8xf32>
    %116 = arith.truncf %115 : vector<2x8x8xf32> to vector<2x8x8xbf16>
    "tpu.trace_start"() <{level = 10 : i32, message = "bqk,bkd->bqd"}> : () -> ()
    %cst_34 = arith.constant dense<0.000000e+00> : vector<2x8x8xf32>
    %117 = tpu.matmul %116, %100, %cst_34 {dimension_numbers = #tpu.dot_dimension_numbers<[2], [1], [1], [2], [0, 0, 0, 1, 1, 2], [0], [0]>} : vector<2x8x8xbf16>, vector<2x8x8xbf16>, vector<2x8x8xf32> -> vector<2x8x8xf32>
    "tpu.trace_stop"() : () -> ()
    %118 = vector.extract_strided_slice %57 {offsets = [0, 0, 24], sizes = [2, 8, 8], strides = [1, 1, 1]} : vector<2x8x96xbf16> to vector<2x8x8xbf16>
    %119 = vector.extract_strided_slice %57 {offsets = [0, 0, 56], sizes = [2, 8, 8], strides = [1, 1, 1]} : vector<2x8x96xbf16> to vector<2x8x8xbf16>
    %120 = vector.extract_strided_slice %57 {offsets = [0, 0, 88], sizes = [2, 8, 8], strides = [1, 1, 1]} : vector<2x8x96xbf16> to vector<2x8x8xbf16>
    "tpu.trace_start"() <{level = 10 : i32, message = "bqd,bkd->bqk"}> : () -> ()
    %cst_35 = arith.constant dense<0.000000e+00> : vector<2x8x8xf32>
    %121 = tpu.matmul %118, %119, %cst_35 {dimension_numbers = #tpu.dot_dimension_numbers<[2], [2], [1], [1], [0, 0, 0, 1, 1, 1], [0], [0]>} : vector<2x8x8xbf16>, vector<2x8x8xbf16>, vector<2x8x8xf32> -> vector<2x8x8xf32>
    "tpu.trace_stop"() : () -> ()
    %122 = vector.broadcast %24 : vector<2x1x8xf32> to vector<2x8x8xf32>
    %123 = arith.addf %121, %122 : vector<2x8x8xf32>
    %cst_36 = arith.constant dense<0xFF800000> : vector<2x8xf32>
    %124 = vector.multi_reduction <maximumf>, %123, %cst_36 [2] : vector<2x8x8xf32> to vector<2x8xf32>
    %125 = vector.shape_cast %124 : vector<2x8xf32> to vector<2x8x1xf32>
    %126 = vector.broadcast %125 : vector<2x8x1xf32> to vector<2x8x8xf32>
    %127 = arith.subf %123, %126 : vector<2x8x8xf32>
    %128 = math.exp %127 : vector<2x8x8xf32>
    %cst_37 = arith.constant dense<0.000000e+00> : vector<2x8xf32>
    %129 = vector.multi_reduction <add>, %128, %cst_37 [2] : vector<2x8x8xf32> to vector<2x8xf32>
    %130 = vector.shape_cast %129 : vector<2x8xf32> to vector<2x8x1xf32>
    %cst_38 = arith.constant 1.000000e-30 : f32
    %131 = vector.broadcast %cst_38 : f32 to vector<2x8x1xf32>
    %132 = arith.maximumf %130, %131 : vector<2x8x1xf32>
    %133 = tpu.reciprocal %132 {approx = true} : vector<2x8x1xf32> -> vector<2x8x1xf32>
    %134 = vector.broadcast %133 : vector<2x8x1xf32> to vector<2x8x8xf32>
    %135 = arith.mulf %128, %134 : vector<2x8x8xf32>
    %136 = arith.truncf %135 : vector<2x8x8xf32> to vector<2x8x8xbf16>
    "tpu.trace_start"() <{level = 10 : i32, message = "bqk,bkd->bqd"}> : () -> ()
    %cst_39 = arith.constant dense<0.000000e+00> : vector<2x8x8xf32>
    %137 = tpu.matmul %136, %120, %cst_39 {dimension_numbers = #tpu.dot_dimension_numbers<[2], [1], [1], [2], [0, 0, 0, 1, 1, 2], [0], [0]>} : vector<2x8x8xbf16>, vector<2x8x8xbf16>, vector<2x8x8xf32> -> vector<2x8x8xf32>
    "tpu.trace_stop"() : () -> ()
    %138 = tpu.concatenate %77, %97, %117, %137 in 2 : vector<2x8x8xf32>, vector<2x8x8xf32>, vector<2x8x8xf32>, vector<2x8x8xf32> -> vector<2x8x32xf32>
    %139 = vector.shape_cast %138 : vector<2x8x32xf32> to vector<16x32xf32>
    %140 = arith.truncf %139 : vector<16x32xf32> to vector<16x32xbf16>
    %c0_40 = arith.constant 0 : index
    %c0_41 = arith.constant 0 : index
    %c0_42 = arith.constant 0 : index
    %141 = vector.load %arg8[%c0_40, %c0_41, %c0_42] : memref<1x32x32xbf16, #tpu.memory_space<vmem>>, vector<1x32x32xbf16>
    %142 = vector.shape_cast %141 : vector<1x32x32xbf16> to vector<32x32xbf16>
    %cst_43 = arith.constant dense<0.000000e+00> : vector<16x32xf32>
    %143 = tpu.matmul %140, %142, %cst_43 {dimension_numbers = #tpu.dot_dimension_numbers<[1], [0], [0], [1], [0, 0, 1, 1], [], []>} : vector<16x32xbf16>, vector<32x32xbf16>, vector<16x32xf32> -> vector<16x32xf32>
    %144 = arith.addf %25, %143 : vector<16x32xf32>
    %c0_44 = arith.constant 0 : index
    %c0_45 = arith.constant 0 : index
    %c0_46 = arith.constant 0 : index
    %145 = vector.load %arg9[%c0_44, %c0_45, %c0_46] : memref<1x1x32xf32, #tpu.memory_space<vmem>>, vector<1x1x32xf32>
    %146 = vector.shape_cast %145 : vector<1x1x32xf32> to vector<1x32xf32>
    %c0_47 = arith.constant 0 : index
    %c0_48 = arith.constant 0 : index
    %c0_49 = arith.constant 0 : index
    %147 = vector.load %arg10[%c0_47, %c0_48, %c0_49] : memref<1x1x32xf32, #tpu.memory_space<vmem>>, vector<1x1x32xf32>
    %148 = vector.shape_cast %147 : vector<1x1x32xf32> to vector<1x32xf32>
    %cst_50 = arith.constant dense<0.000000e+00> : vector<16xf32>
    %149 = vector.multi_reduction <add>, %144, %cst_50 [1] : vector<16x32xf32> to vector<16xf32>
    %150 = vector.shape_cast %149 : vector<16xf32> to vector<16x1xf32>
    %cst_51 = arith.constant 3.200000e+01 : f32
    %151 = vector.broadcast %cst_51 : f32 to vector<16x1xf32>
    %152 = arith.divf %150, %151 : vector<16x1xf32>
    %153 = vector.broadcast %152 : vector<16x1xf32> to vector<16x32xf32>
    %154 = arith.subf %144, %153 : vector<16x32xf32>
    %155 = arith.mulf %154, %154 : vector<16x32xf32>
    %cst_52 = arith.constant dense<0.000000e+00> : vector<16xf32>
    %156 = vector.multi_reduction <add>, %155, %cst_52 [1] : vector<16x32xf32> to vector<16xf32>
    %157 = vector.shape_cast %156 : vector<16xf32> to vector<16x1xf32>
    %cst_53 = arith.constant 3.200000e+01 : f32
    %158 = vector.broadcast %cst_53 : f32 to vector<16x1xf32>
    %159 = arith.divf %157, %158 : vector<16x1xf32>
    %160 = vector.broadcast %152 : vector<16x1xf32> to vector<16x32xf32>
    %161 = arith.subf %144, %160 : vector<16x32xf32>
    %cst_54 = arith.constant 9.99999997E-7 : f32
    %162 = vector.broadcast %cst_54 : f32 to vector<16x1xf32>
    %163 = arith.addf %159, %162 : vector<16x1xf32>
    %164 = math.rsqrt %163 : vector<16x1xf32>
    %165 = vector.broadcast %164 : vector<16x1xf32> to vector<16x32xf32>
    %166 = arith.mulf %161, %165 : vector<16x32xf32>
    %167 = vector.broadcast %146 : vector<1x32xf32> to vector<16x32xf32>
    %168 = arith.mulf %166, %167 : vector<16x32xf32>
    %169 = vector.broadcast %148 : vector<1x32xf32> to vector<16x32xf32>
    %170 = arith.addf %168, %169 : vector<16x32xf32>
    %171 = arith.truncf %170 : vector<16x32xf32> to vector<16x32xbf16>
    %c0_55 = arith.constant 0 : index
    %c0_56 = arith.constant 0 : index
    %c0_57 = arith.constant 0 : index
    %172 = vector.load %arg11[%c0_55, %c0_56, %c0_57] : memref<1x32x128xbf16, #tpu.memory_space<vmem>>, vector<1x32x128xbf16>
    %173 = vector.shape_cast %172 : vector<1x32x128xbf16> to vector<32x128xbf16>
    %cst_58 = arith.constant dense<0.000000e+00> : vector<16x128xf32>
    %174 = tpu.matmul %171, %173, %cst_58 {dimension_numbers = #tpu.dot_dimension_numbers<[1], [0], [0], [1], [0, 0, 1, 1], [], []>} : vector<16x32xbf16>, vector<32x128xbf16>, vector<16x128xf32> -> vector<16x128xf32>
    %cst_59 = arith.constant 0.000000e+00 : f32
    %175 = vector.broadcast %cst_59 : f32 to vector<16x128xf32>
    %176 = arith.maximumf %174, %175 : vector<16x128xf32>
    %177 = arith.truncf %176 : vector<16x128xf32> to vector<16x128xbf16>
    %c0_60 = arith.constant 0 : index
    %c0_61 = arith.constant 0 : index
    %c0_62 = arith.constant 0 : index
    %178 = vector.load %arg12[%c0_60, %c0_61, %c0_62] : memref<1x128x32xbf16, #tpu.memory_space<vmem>>, vector<1x128x32xbf16>
    %179 = vector.shape_cast %178 : vector<1x128x32xbf16> to vector<128x32xbf16>
    %cst_63 = arith.constant dense<0.000000e+00> : vector<16x32xf32>
    %180 = tpu.matmul %177, %179, %cst_63 {dimension_numbers = #tpu.dot_dimension_numbers<[1], [0], [0], [1], [0, 0, 1, 1], [], []>} : vector<16x128xbf16>, vector<128x32xbf16>, vector<16x32xf32> -> vector<16x32xf32>
    %181 = arith.addf %144, %180 : vector<16x32xf32>
    %c0_64 = arith.constant 0 : index
    %c0_65 = arith.constant 0 : index
    %182 = vector.load %arg16[%c0_64, %c0_65] : memref<16x32xf32, #tpu.memory_space<vmem>>, vector<16x32xf32>
    tpu.vector_store %arg16[%c0_64, %c0_65], %181 {strides = array<i32>} : memref<16x32xf32, #tpu.memory_space<vmem>>, vector<16x32xf32>,
    %c1_i32_66 = arith.constant 1 : i32
    %183 = arith.cmpi eq, %arg1, %c1_i32_66 : i32
    %184 = arith.extui %183 : i1 to i32
    %c0_i32_67 = arith.constant 0 : i32
    %185 = arith.cmpi ne, %184, %c0_i32_67 : i32
    scf.if %185 {
      %c0_68 = arith.constant 0 : index
      %c0_69 = arith.constant 0 : index
      %186 = vector.load %arg13[%c0_68, %c0_69] : memref<1x32xf32, #tpu.memory_space<vmem>>, vector<1x32xf32>
      %c0_70 = arith.constant 0 : index
      %c0_71 = arith.constant 0 : index
      %187 = vector.load %arg14[%c0_70, %c0_71] : memref<1x32xf32, #tpu.memory_space<vmem>>, vector<1x32xf32>
      %cst_72 = arith.constant dense<0.000000e+00> : vector<16xf32>
      %188 = vector.multi_reduction <add>, %181, %cst_72 [1] : vector<16x32xf32> to vector<16xf32>
      %189 = vector.shape_cast %188 : vector<16xf32> to vector<16x1xf32>
      %cst_73 = arith.constant 3.200000e+01 : f32
      %190 = vector.broadcast %cst_73 : f32 to vector<16x1xf32>
      %191 = arith.divf %189, %190 : vector<16x1xf32>
      %192 = vector.broadcast %191 : vector<16x1xf32> to vector<16x32xf32>
      %193 = arith.subf %181, %192 : vector<16x32xf32>
      %194 = arith.mulf %193, %193 : vector<16x32xf32>
      %cst_74 = arith.constant dense<0.000000e+00> : vector<16xf32>
      %195 = vector.multi_reduction <add>, %194, %cst_74 [1] : vector<16x32xf32> to vector<16xf32>
      %196 = vector.shape_cast %195 : vector<16xf32> to vector<16x1xf32>
      %cst_75 = arith.constant 3.200000e+01 : f32
      %197 = vector.broadcast %cst_75 : f32 to vector<16x1xf32>
      %198 = arith.divf %196, %197 : vector<16x1xf32>
      %199 = vector.broadcast %191 : vector<16x1xf32> to vector<16x32xf32>
      %200 = arith.subf %181, %199 : vector<16x32xf32>
      %cst_76 = arith.constant 9.99999997E-7 : f32
      %201 = vector.broadcast %cst_76 : f32 to vector<16x1xf32>
      %202 = arith.addf %198, %201 : vector<16x1xf32>
      %203 = math.rsqrt %202 : vector<16x1xf32>
      %204 = vector.broadcast %203 : vector<16x1xf32> to vector<16x32xf32>
      %205 = arith.mulf %200, %204 : vector<16x32xf32>
      %206 = vector.broadcast %186 : vector<1x32xf32> to vector<16x32xf32>
      %207 = arith.mulf %205, %206 : vector<16x32xf32>
      %208 = vector.broadcast %187 : vector<1x32xf32> to vector<16x32xf32>
      %209 = arith.addf %207, %208 : vector<16x32xf32>
      %210 = vector.shape_cast %209 : vector<16x32xf32> to vector<2x8x32xf32>
      %c0_77 = arith.constant 0 : index
      %c0_78 = arith.constant 0 : index
      %c0_79 = arith.constant 0 : index
      %211 = vector.load %arg15[%c0_77, %c0_78, %c0_79] : memref<2x8x32xf32, #tpu.memory_space<vmem>>, vector<2x8x32xf32>
      tpu.vector_store %arg15[%c0_77, %c0_78, %c0_79], %210 {strides = array<i32>} : memref<2x8x32xf32, #tpu.memory_space<vmem>>, vector<2x8x32xf32>,
    } else {
    }
    return
  }
  func.func @transform_0(%arg0: i32, %arg1: i32, %arg2: memref<2xi32, #tpu.memory_space<smem>>) -> (i32, i32, i32) {
    %c0_i32 = arith.constant 0 : i32
    %c0_i32_0 = arith.constant 0 : i32
    %c0_i32_1 = arith.constant 0 : i32
    return %arg0, %c0_i32, %c0_i32_0 : i32, i32, i32
  }
  func.func @transform_1(%arg0: i32, %arg1: i32, %arg2: memref<2xi32, #tpu.memory_space<smem>>) -> (i32, i32) {
    %c0_i32 = arith.constant 0 : i32
    %c0_i32_0 = arith.constant 0 : i32
    %c0_i32_1 = arith.constant 0 : i32
    return %c0_i32, %c0_i32_0 : i32, i32
  }
  func.func @transform_2(%arg0: i32, %arg1: i32, %arg2: memref<2xi32, #tpu.memory_space<smem>>) -> (i32, i32, i32) {
    %c0_i32 = arith.constant 0 : i32
    %c0_i32_0 = arith.constant 0 : i32
    %c0_i32_1 = arith.constant 0 : i32
    return %arg1, %c0_i32, %c0_i32_0 : i32, i32, i32
  }
  func.func @transform_3(%arg0: i32, %arg1: i32, %arg2: memref<2xi32, #tpu.memory_space<smem>>) -> (i32, i32, i32) {
    %c0_i32 = arith.constant 0 : i32
    %c0_i32_0 = arith.constant 0 : i32
    %c0_i32_1 = arith.constant 0 : i32
    return %arg1, %c0_i32, %c0_i32_0 : i32, i32, i32
  }
  func.func @transform_4(%arg0: i32, %arg1: i32, %arg2: memref<2xi32, #tpu.memory_space<smem>>) -> (i32, i32, i32) {
    %c0_i32 = arith.constant 0 : i32
    %c0_i32_0 = arith.constant 0 : i32
    %c0_i32_1 = arith.constant 0 : i32
    return %arg1, %c0_i32, %c0_i32_0 : i32, i32, i32
  }
  func.func @transform_5(%arg0: i32, %arg1: i32, %arg2: memref<2xi32, #tpu.memory_space<smem>>) -> (i32, i32, i32) {
    %c0_i32 = arith.constant 0 : i32
    %c0_i32_0 = arith.constant 0 : i32
    %c0_i32_1 = arith.constant 0 : i32
    return %arg1, %c0_i32, %c0_i32_0 : i32, i32, i32
  }
  func.func @transform_6(%arg0: i32, %arg1: i32, %arg2: memref<2xi32, #tpu.memory_space<smem>>) -> (i32, i32, i32) {
    %c0_i32 = arith.constant 0 : i32
    %c0_i32_0 = arith.constant 0 : i32
    %c0_i32_1 = arith.constant 0 : i32
    return %arg1, %c0_i32, %c0_i32_0 : i32, i32, i32
  }
  func.func @transform_7(%arg0: i32, %arg1: i32, %arg2: memref<2xi32, #tpu.memory_space<smem>>) -> (i32, i32, i32) {
    %c0_i32 = arith.constant 0 : i32
    %c0_i32_0 = arith.constant 0 : i32
    %c0_i32_1 = arith.constant 0 : i32
    return %arg1, %c0_i32, %c0_i32_0 : i32, i32, i32
  }
  func.func @transform_8(%arg0: i32, %arg1: i32, %arg2: memref<2xi32, #tpu.memory_space<smem>>) -> (i32, i32, i32) {
    %c0_i32 = arith.constant 0 : i32
    %c0_i32_0 = arith.constant 0 : i32
    %c0_i32_1 = arith.constant 0 : i32
    return %arg1, %c0_i32, %c0_i32_0 : i32, i32, i32
  }
  func.func @transform_9(%arg0: i32, %arg1: i32, %arg2: memref<2xi32, #tpu.memory_space<smem>>) -> (i32, i32, i32) {
    %c0_i32 = arith.constant 0 : i32
    %c0_i32_0 = arith.constant 0 : i32
    %c0_i32_1 = arith.constant 0 : i32
    return %arg1, %c0_i32, %c0_i32_0 : i32, i32, i32
  }
  func.func @transform_10(%arg0: i32, %arg1: i32, %arg2: memref<2xi32, #tpu.memory_space<smem>>) -> (i32, i32) {
    %c0_i32 = arith.constant 0 : i32
    %c0_i32_0 = arith.constant 0 : i32
    %c0_i32_1 = arith.constant 0 : i32
    return %c0_i32, %c0_i32_0 : i32, i32
  }
  func.func @transform_11(%arg0: i32, %arg1: i32, %arg2: memref<2xi32, #tpu.memory_space<smem>>) -> (i32, i32) {
    %c0_i32 = arith.constant 0 : i32
    %c0_i32_0 = arith.constant 0 : i32
    %c0_i32_1 = arith.constant 0 : i32
    return %c0_i32, %c0_i32_0 : i32, i32
  }
  func.func @transform_12(%arg0: i32, %arg1: i32, %arg2: memref<2xi32, #tpu.memory_space<smem>>) -> (i32, i32, i32) {
    %c0_i32 = arith.constant 0 : i32
    %c0_i32_0 = arith.constant 0 : i32
    %c0_i32_1 = arith.constant 0 : i32
    return %arg0, %c0_i32, %c0_i32_0 : i32, i32, i32
  }
}

</mosaic_0001>

<llo_original>
// kernel: tpu_custom_call.1
$region0: #{tpu_custom_call.1}
  #allocation0 [shape = 'u32[]', space=smem, size = 0x4, offset = 0x4, fixed_abs, tag = 'smem constant byte address 0x4 - core index']
  #allocation1 [shape = 'u32[144,128]{1,0:T(1,128)}', space=vmem, size = 0x12000, scoped, tag = 'internal scratch']
  #allocation2 [shape = 'f32[16,32]{1,0:T(8,128)}', space=vmem, size = 0x2000, scoped, tag = 'scratch operand']
  #allocation3 [shape = 's32[1]{0}', space=sflag, size = 0x4, scoped, tag = 'scoped memory for tpu_custom_call.1']
  #allocation4 [shape = 'u8[512]{0}', space=smem, size = 0x200, scoped, tag = 'prefetched SMEM operand 0']
  %s0 = inlined_call_operand.vmem [shape: s32[2], index: 0, kind: input, shape index: {}]
  %s1 = inlined_call_operand.vmem [shape: f32[2,8,32], index: 1, kind: input, shape index: {}]
  %s2 = inlined_call_operand.vmem [shape: f32[8,32], index: 2, kind: input, shape index: {}]
  %s3 = inlined_call_operand.vmem [shape: f32[2,1,32], index: 3, kind: input, shape index: {}]
  %s4 = inlined_call_operand.vmem [shape: f32[2,1,32], index: 4, kind: input, shape index: {}]
  %s5 = inlined_call_operand.vmem [shape: bf16[2,32,96], index: 5, kind: input, shape index: {}]
  %s6 = inlined_call_operand.vmem [shape: bf16[2,32,32], index: 6, kind: input, shape index: {}]
  %s7 = inlined_call_operand.vmem [shape: f32[2,1,32], index: 7, kind: input, shape index: {}]
  %s8 = inlined_call_operand.vmem [shape: f32[2,1,32], index: 8, kind: input, shape index: {}]
  %s9 = inlined_call_operand.vmem [shape: bf16[2,32,128], index: 9, kind: input, shape index: {}]
  %s10 = inlined_call_operand.vmem [shape: bf16[2,128,32], index: 10, kind: input, shape index: {}]
  %s11 = inlined_call_operand.vmem [shape: f32[1,32], index: 11, kind: input, shape index: {}]
  %s12 = inlined_call_operand.vmem [shape: f32[1,32], index: 12, kind: input, shape index: {}]
  %s13 = inlined_call_operand.hbm [shape: f32[2,8,32], index: 13, kind: output, shape index: {}]
  %s14 = sld [smem:[#allocation0]]
  $region89: #{tpu_custom_call.1} parent=0
    _
  %s16 = ssub.s32 1, %s14
  %s17 = scalar_select 0, %s16, %s14
  %s18 = sshll.u32 %s0, 4
  %s19 = int_to_ptr.vmem [resolvable:$true] %s18
  %21 = dma.vmem_to_smem %s19, 16, [#allocation4], [#allocation3]
  %22 = dma.done [#allocation3], 16
  %23 = sfence
  $region1: #{tpu_custom_call.1} parent=0
    #allocation5 [shape = 'u8[8192]{0}', space=vmem, size = 0x2000, scoped, tag = 'output window, operand 0, single buffered']
    #allocation6 [shape = 's32[2]{0}', space=sflag, size = 0x8, scoped, tag = 'scoped memory for tpu_custom_call.1']
    %24 = vsyncpa [#allocation6], 0
    loop: start=0, step=1, limit=4
    $region2: #{tpu_custom_call.1} parent=1 // loop_pre_header
      _
    $region3: #{tpu_custom_call.1} parent=1 // loop_header
      %s26 = sphi 0, %s30
      %p27 = scmp.ge.s32.totalorder %s26, 4
      %s33 = sphi 0, %s45
      %s34 = sphi 0, %s41
      %s35 = sphi 0, %s33
      %s36 = sphi 0, %s34
      %s37 = sphi 0, %s35
      %s38 = sphi 0, %s36
      %s48 = sphi 0, %s50
      %s51 = sphi 0, %s48
      %s52 = sphi 0, %s51
      %s68 = sphi 0, %s52
      %s72 = sphi 0, %s72
      %s74 = sphi 0, %s72
      %s75 = sphi 0, %s74
      %s89 = sphi 0, %s75
      %s95 = sphi 0, %s97
      %s98 = sphi 0, %s95
      %s99 = sphi 0, %s98
      %s115 = sphi 0, %s99
      %s121 = sphi 0, %s123
      %s124 = sphi 0, %s121
      %s125 = sphi 0, %s124
      %s141 = sphi 0, %s125
      %s147 = sphi 0, %s149
      %s150 = sphi 0, %s147
      %s151 = sphi 0, %s150
      %s167 = sphi 0, %s151
      %s173 = sphi 0, %s175
      %s176 = sphi 0, %s173
      %s177 = sphi 0, %s176
      %s193 = sphi 0, %s177
      %s199 = sphi 0, %s201
      %s202 = sphi 0, %s199
      %s203 = sphi 0, %s202
      %s219 = sphi 0, %s203
      %s225 = sphi 0, %s227
      %s228 = sphi 0, %s225
      %s229 = sphi 0, %s228
      %s245 = sphi 0, %s229
      %s251 = sphi 0, %s253
      %s254 = sphi 0, %s251
      %s255 = sphi 0, %s254
      %s271 = sphi 0, %s255
      %s277 = sphi 0, %s279
      %s280 = sphi 0, %s277
      %s281 = sphi 0, %s280
      %s297 = sphi 0, %s281
      %s301 = sphi 0, %s301
      %s303 = sphi 0, %s301
      %s304 = sphi 0, %s303
      %s318 = sphi 0, %s304
      %s322 = sphi 0, %s322
      %s324 = sphi 0, %s322
      %s325 = sphi 0, %s324
      %s339 = sphi 0, %s325
      %s345 = sphi 0, %s347
      %s348 = sphi 0, %s345
      %s349 = sphi 0, %s348
      %s365 = sphi 0, %s349
    $region4: #{tpu_custom_call.1} parent=1 // loop_header_branch
      %29 = sbr.rel (%p27) target = $region8
    $region5: #{tpu_custom_call.1} parent=1 // loop_body
      %s31 = ssub.s32 %s26, 1
      %s32 = ssub.s32 %s26, 2
      %s39 = sadd.s32 1, %s34
      %p40 = scmp.ge.s32.totalorder %s39, 2
      %s41 = scalar_select %p40, 0, %s39
      %s42 = sadd.s32 1, %s33
      %s43 = scalar_select %p40, %s42, %s33
      %p44 = scmp.ge.s32.totalorder %s43, 1
      %s45 = scalar_select %p44, 0, %s43
      %s46 = ssub.s32 %s33, %s45
      %p47 = scmp.eq.s32.totalorder %s46, 0
      %s49 = sadd.s32 %s48, 1
      %s50 = scalar_select %p47, %s48, %s49
      %p53 = pneg %p47
      %p54 = scmp.eq.s32.totalorder %s26, 1
      %p55 = por %p53, %p54
      %p56 = scmp.ne.s32.totalorder %s48, %s51
      %p57 = scmp.eq.s32.totalorder %s26, 0
      %p58 = por %p56, %p57
      %p59 = scmp.ne.s32.totalorder %s48, %s51
      %p60 = scmp.eq.s32.totalorder %s31, 1
      %p61 = por %p59, %p60
      %p62 = scmp.ne.s32.totalorder %s51, %s52
      %p63 = scmp.eq.s32.totalorder %s31, 0
      %p64 = por %p62, %p63
      %p65 = scmp.ne.s32.totalorder %s51, %s52
      %p66 = scmp.eq.s32.totalorder %s32, 1
      %p67 = por %p65, %p66
      %p69 = scmp.ne.s32.totalorder %s52, %s68
      %p70 = scmp.eq.s32.totalorder %s32, 0
      %p71 = por %p69, %p70
      %s73 = sadd.s32 %s72, 1
      %p76 = scmp.eq.s32.totalorder %s26, 1
      %p77 = scmp.ne.s32.totalorder %s72, %s74
      %p78 = scmp.eq.s32.totalorder %s26, 0
      %p79 = por %p77, %p78
      %p80 = scmp.ne.s32.totalorder %s72, %s74
      %p81 = scmp.eq.s32.totalorder %s31, 1
      %p82 = por %p80, %p81
      %p83 = scmp.ne.s32.totalorder %s74, %s75
      %p84 = scmp.eq.s32.totalorder %s31, 0
      %p85 = por %p83, %p84
      %p86 = scmp.ne.s32.totalorder %s74, %s75
      %p87 = scmp.eq.s32.totalorder %s32, 1
      %p88 = por %p86, %p87
      %p90 = scmp.ne.s32.totalorder %s75, %s89
      %p91 = scmp.eq.s32.totalorder %s32, 0
      %p92 = por %p90, %p91
      %s93 = ssub.s32 %s34, %s41
      %p94 = scmp.eq.s32.totalorder %s93, 0
      %s96 = sadd.s32 %s95, 1
      %s97 = scalar_select %p94, %s95, %s96
      %p100 = pneg %p94
      %p101 = scmp.eq.s32.totalorder %s26, 1
      %p102 = por %p100, %p101
      %p103 = scmp.ne.s32.totalorder %s95, %s98
      %p104 = scmp.eq.s32.totalorder %s26, 0
      %p105 = por %p103, %p104
      %p106 = scmp.ne.s32.totalorder %s95, %s98
      %p107 = scmp.eq.s32.totalorder %s31, 1
      %p108 = por %p106, %p107
      %p109 = scmp.ne.s32.totalorder %s98, %s99
      %p110 = scmp.eq.s32.totalorder %s31, 0
      %p111 = por %p109, %p110
      %p112 = scmp.ne.s32.totalorder %s98, %s99
      %p113 = scmp.eq.s32.totalorder %s32, 1
      %p114 = por %p112, %p113
      %p116 = scmp.ne.s32.totalorder %s99, %s115
      %p117 = scmp.eq.s32.totalorder %s32, 0
      %p118 = por %p116, %p117
      %s119 = ssub.s32 %s34, %s41
      %p120 = scmp.eq.s32.totalorder %s119, 0
      %s122 = sadd.s32 %s121, 1
      %s123 = scalar_select %p120, %s121, %s122
      %p126 = pneg %p120
      %p127 = scmp.eq.s32.totalorder %s26, 1
      %p128 = por %p126, %p127
      %p129 = scmp.ne.s32.totalorder %s121, %s124
      %p130 = scmp.eq.s32.totalorder %s26, 0
      %p131 = por %p129, %p130
      %p132 = scmp.ne.s32.totalorder %s121, %s124
      %p133 = scmp.eq.s32.totalorder %s31, 1
      %p134 = por %p132, %p133
      %p135 = scmp.ne.s32.totalorder %s124, %s125
      %p136 = scmp.eq.s32.totalorder %s31, 0
      %p137 = por %p135, %p136
      %p138 = scmp.ne.s32.totalorder %s124, %s125
      %p139 = scmp.eq.s32.totalorder %s32, 1
      %p140 = por %p138, %p139
      %p142 = scmp.ne.s32.totalorder %s125, %s141
      %p143 = scmp.eq.s32.totalorder %s32, 0
      %p144 = por %p142, %p143
      %s145 = ssub.s32 %s34, %s41
      %p146 = scmp.eq.s32.totalorder %s145, 0
      %s148 = sadd.s32 %s147, 1
      %s149 = scalar_select %p146, %s147, %s148
      %p152 = pneg %p146
      %p153 = scmp.eq.s32.totalorder %s26, 1
      %p154 = por %p152, %p153
      %p155 = scmp.ne.s32.totalorder %s147, %s150
      %p156 = scmp.eq.s32.totalorder %s26, 0
      %p157 = por %p155, %p156
      %p158 = scmp.ne.s32.totalorder %s147, %s150
      %p159 = scmp.eq.s32.totalorder %s31, 1
      %p160 = por %p158, %p159
      %p161 = scmp.ne.s32.totalorder %s150, %s151
      %p162 = scmp.eq.s32.totalorder %s31, 0
      %p163 = por %p161, %p162
      %p164 = scmp.ne.s32.totalorder %s150, %s151
      %p165 = scmp.eq.s32.totalorder %s32, 1
      %p166 = por %p164, %p165
      %p168 = scmp.ne.s32.totalorder %s151, %s167
      %p169 = scmp.eq.s32.totalorder %s32, 0
      %p170 = por %p168, %p169
      %s171 = ssub.s32 %s34, %s41
      %p172 = scmp.eq.s32.totalorder %s171, 0
      %s174 = sadd.s32 %s173, 1
      %s175 = scalar_select %p172, %s173, %s174
      %p178 = pneg %p172
      %p179 = scmp.eq.s32.totalorder %s26, 1
      %p180 = por %p178, %p179
      %p181 = scmp.ne.s32.totalorder %s173, %s176
      %p182 = scmp.eq.s32.totalorder %s26, 0
      %p183 = por %p181, %p182
      %p184 = scmp.ne.s32.totalorder %s173, %s176
      %p185 = scmp.eq.s32.totalorder %s31, 1
      %p186 = por %p184, %p185
      %p187 = scmp.ne.s32.totalorder %s176, %s177
      %p188 = scmp.eq.s32.totalorder %s31, 0
      %p189 = por %p187, %p188
      %p190 = scmp.ne.s32.totalorder %s176, %s177
      %p191 = scmp.eq.s32.totalorder %s32, 1
      %p192 = por %p190, %p191
      %p194 = scmp.ne.s32.totalorder %s177, %s193
      %p195 = scmp.eq.s32.totalorder %s32, 0
      %p196 = por %p194, %p195
      %s197 = ssub.s32 %s34, %s41
      %p198 = scmp.eq.s32.totalorder %s197, 0
      %s200 = sadd.s32 %s199, 1
      %s201 = scalar_select %p198, %s199, %s200
      %p204 = pneg %p198
      %p205 = scmp.eq.s32.totalorder %s26, 1
      %p206 = por %p204, %p205
      %p207 = scmp.ne.s32.totalorder %s199, %s202
      %p208 = scmp.eq.s32.totalorder %s26, 0
      %p209 = por %p207, %p208
      %p210 = scmp.ne.s32.totalorder %s199, %s202
      %p211 = scmp.eq.s32.totalorder %s31, 1
      %p212 = por %p210, %p211
      %p213 = scmp.ne.s32.totalorder %s202, %s203
      %p214 = scmp.eq.s32.totalorder %s31, 0
      %p215 = por %p213, %p214
      %p216 = scmp.ne.s32.totalorder %s202, %s203
      %p217 = scmp.eq.s32.totalorder %s32, 1
      %p218 = por %p216, %p217
      %p220 = scmp.ne.s32.totalorder %s203, %s219
      %p221 = scmp.eq.s32.totalorder %s32, 0
      %p222 = por %p220, %p221
      %s223 = ssub.s32 %s34, %s41
      %p224 = scmp.eq.s32.totalorder %s223, 0
      %s226 = sadd.s32 %s225, 1
      %s227 = scalar_select %p224, %s225, %s226
      %p230 = pneg %p224
      %p231 = scmp.eq.s32.totalorder %s26, 1
      %p232 = por %p230, %p231
      %p233 = scmp.ne.s32.totalorder %s225, %s228
      %p234 = scmp.eq.s32.totalorder %s26, 0
      %p235 = por %p233, %p234
      %p236 = scmp.ne.s32.totalorder %s225, %s228
      %p237 = scmp.eq.s32.totalorder %s31, 1
      %p238 = por %p236, %p237
      %p239 = scmp.ne.s32.totalorder %s228, %s229
      %p240 = scmp.eq.s32.totalorder %s31, 0
      %p241 = por %p239, %p240
      %p242 = scmp.ne.s32.totalorder %s228, %s229
      %p243 = scmp.eq.s32.totalorder %s32, 1
      %p244 = por %p242, %p243
      %p246 = scmp.ne.s32.totalorder %s229, %s245
      %p247 = scmp.eq.s32.totalorder %s32, 0
      %p248 = por %p246, %p247
      %s249 = ssub.s32 %s34, %s41
      %p250 = scmp.eq.s32.totalorder %s249, 0
      %s252 = sadd.s32 %s251, 1
      %s253 = scalar_select %p250, %s251, %s252
      %p256 = pneg %p250
      %p257 = scmp.eq.s32.totalorder %s26, 1
      %p258 = por %p256, %p257
      %p259 = scmp.ne.s32.totalorder %s251, %s254
      %p260 = scmp.eq.s32.totalorder %s26, 0
      %p261 = por %p259, %p260
      %p262 = scmp.ne.s32.totalorder %s251, %s254
      %p263 = scmp.eq.s32.totalorder %s31, 1
      %p264 = por %p262, %p263
      %p265 = scmp.ne.s32.totalorder %s254, %s255
      %p266 = scmp.eq.s32.totalorder %s31, 0
      %p267 = por %p265, %p266
      %p268 = scmp.ne.s32.totalorder %s254, %s255
      %p269 = scmp.eq.s32.totalorder %s32, 1
      %p270 = por %p268, %p269
      %p272 = scmp.ne.s32.totalorder %s255, %s271
      %p273 = scmp.eq.s32.totalorder %s32, 0
      %p274 = por %p272, %p273
      %s275 = ssub.s32 %s34, %s41
      %p276 = scmp.eq.s32.totalorder %s275, 0
      %s278 = sadd.s32 %s277, 1
      %s279 = scalar_select %p276, %s277, %s278
      %p282 = pneg %p276
      %p283 = scmp.eq.s32.totalorder %s26, 1
      %p284 = por %p282, %p283
      %p285 = scmp.ne.s32.totalorder %s277, %s280
      %p286 = scmp.eq.s32.totalorder %s26, 0
      %p287 = por %p285, %p286
      %p288 = scmp.ne.s32.totalorder %s277, %s280
      %p289 = scmp.eq.s32.totalorder %s31, 1
      %p290 = por %p288, %p289
      %p291 = scmp.ne.s32.totalorder %s280, %s281
      %p292 = scmp.eq.s32.totalorder %s31, 0
      %p293 = por %p291, %p292
      %p294 = scmp.ne.s32.totalorder %s280, %s281
      %p295 = scmp.eq.s32.totalorder %s32, 1
      %p296 = por %p294, %p295
      %p298 = scmp.ne.s32.totalorder %s281, %s297
      %p299 = scmp.eq.s32.totalorder %s32, 0
      %p300 = por %p298, %p299
      %s302 = sadd.s32 %s301, 1
      %p305 = scmp.eq.s32.totalorder %s26, 1
      %p306 = scmp.ne.s32.totalorder %s301, %s303
      %p307 = scmp.eq.s32.totalorder %s26, 0
      %p308 = por %p306, %p307
      %p309 = scmp.ne.s32.totalorder %s301, %s303
      %p310 = scmp.eq.s32.totalorder %s31, 1
      %p311 = por %p309, %p310
      %p312 = scmp.ne.s32.totalorder %s303, %s304
      %p313 = scmp.eq.s32.totalorder %s31, 0
      %p314 = por %p312, %p313
      %p315 = scmp.ne.s32.totalorder %s303, %s304
      %p316 = scmp.eq.s32.totalorder %s32, 1
      %p317 = por %p315, %p316
      %p319 = scmp.ne.s32.totalorder %s304, %s318
      %p320 = scmp.eq.s32.totalorder %s32, 0
      %p321 = por %p319, %p320
      %s323 = sadd.s32 %s322, 1
      %p326 = scmp.eq.s32.totalorder %s26, 1
      %p327 = scmp.ne.s32.totalorder %s322, %s324
      %p328 = scmp.eq.s32.totalorder %s26, 0
      %p329 = por %p327, %p328
      %p330 = scmp.ne.s32.totalorder %s322, %s324
      %p331 = scmp.eq.s32.totalorder %s31, 1
      %p332 = por %p330, %p331
      %p333 = scmp.ne.s32.totalorder %s324, %s325
      %p334 = scmp.eq.s32.totalorder %s31, 0
      %p335 = por %p333, %p334
      %p336 = scmp.ne.s32.totalorder %s324, %s325
      %p337 = scmp.eq.s32.totalorder %s32, 1
      %p338 = por %p336, %p337
      %p340 = scmp.ne.s32.totalorder %s325, %s339
      %p341 = scmp.eq.s32.totalorder %s32, 0
      %p342 = por %p340, %p341
      %s343 = ssub.s32 %s33, %s45
      %p344 = scmp.eq.s32.totalorder %s343, 0
      %s346 = sadd.s32 %s345, 1
      %s347 = scalar_select %p344, %s345, %s346
      %p350 = pneg %p344
      %p351 = scmp.eq.s32.totalorder %s26, 1
      %p352 = por %p350, %p351
      %p353 = scmp.ne.s32.totalorder %s345, %s348
      %p354 = scmp.eq.s32.totalorder %s26, 0
      %p355 = por %p353, %p354
      %p356 = scmp.ne.s32.totalorder %s345, %s348
      %p357 = scmp.eq.s32.totalorder %s31, 1
      %p358 = por %p356, %p357
      %p359 = scmp.ne.s32.totalorder %s348, %s349
      %p360 = scmp.eq.s32.totalorder %s31, 0
      %p361 = por %p359, %p360
      %p362 = scmp.ne.s32.totalorder %s348, %s349
      %p363 = scmp.eq.s32.totalorder %s32, 1
      %p364 = por %p362, %p363
      %p366 = scmp.ne.s32.totalorder %s349, %s365
      %p367 = scmp.eq.s32.totalorder %s32, 0
      %p368 = por %p366, %p367
      %p369 = scmp.le.s32.totalorder 1, %s26
      %p370 = scmp.lt.s32.totalorder %s26, 3
      %p371 = pnand %p369, %p370
      %p372 = pneg %p371
      // Predicated region
      $region9: #{tpu_custom_call.1} parent=5 // pred_check
        _
      $region10: #{tpu_custom_call.1} parent=5 // pred_check_branch
        %374 = sbr.rel (%p371) target = $region12
      $region11: #{tpu_custom_call.1} parent=5 // pred_region
        %s375 = ssub.s32 %s26, 1
        // Predicated region
        $region13: #{tpu_custom_call.1} parent=11 // pred_check
          %p376 = pneg %p64
        $region14: #{tpu_custom_call.1} parent=11 // pred_check_branch
          %378 = sbr.rel (%p376) target = $region16
        $region15: #{tpu_custom_call.1} parent=11 // pred_region
          %s379 = smul.u32 2, %s35
          %p380 = scmp.lt.s32.totalorder %s379, 1
          %s381 = scalar_select %p380, %s379, 1
          %s382 = smul.addr %s381, 8
          %s383 = scalar_lea.vmem %s1, %s382
          %s384 = smul.u32 2, %s35
        $region16: #{tpu_custom_call.1} parent=11 // pred_fallthru
          _
        // Predicated region
        $region17: #{tpu_custom_call.1} parent=11 // pred_check
          %p385 = pneg %p85
        $region18: #{tpu_custom_call.1} parent=11 // pred_check_branch
          %387 = sbr.rel (%p385) target = $region20
        $region19: #{tpu_custom_call.1} parent=11 // pred_region
          _
        $region20: #{tpu_custom_call.1} parent=11 // pred_fallthru
          _
        // Predicated region
        $region21: #{tpu_custom_call.1} parent=11 // pred_check
          %p388 = pneg %p314
        $region22: #{tpu_custom_call.1} parent=11 // pred_check_branch
          %390 = sbr.rel (%p388) target = $region24
        $region23: #{tpu_custom_call.1} parent=11 // pred_region
          _
        $region24: #{tpu_custom_call.1} parent=11 // pred_fallthru
          _
        // Predicated region
        $region25: #{tpu_custom_call.1} parent=11 // pred_check
          %p391 = pneg %p335
        $region26: #{tpu_custom_call.1} parent=11 // pred_check_branch
          %393 = sbr.rel (%p391) target = $region28
        $region27: #{tpu_custom_call.1} parent=11 // pred_region
          _
        $region28: #{tpu_custom_call.1} parent=11 // pred_fallthru
          _
      $region12: #{tpu_custom_call.1} parent=5 // pred_fallthru
        _
      %p394 = scmp.lt.s32.totalorder %s26, 2
      // Predicated region
      $region29: #{tpu_custom_call.1} parent=5 // pred_check
        %p395 = pneg %p394
      $region30: #{tpu_custom_call.1} parent=5 // pred_check_branch
        %397 = sbr.rel (%p395) target = $region32
      $region31: #{tpu_custom_call.1} parent=5 // pred_region
        // Predicated region
        $region33: #{tpu_custom_call.1} parent=31 // pred_check
          %p398 = pneg %p105
        $region34: #{tpu_custom_call.1} parent=31 // pred_check_branch
          %400 = sbr.rel (%p398) target = $region36
        $region35: #{tpu_custom_call.1} parent=31 // pred_region
          %p401 = scmp.lt.s32.totalorder %s34, 1
          %s402 = scalar_select %p401, %s34, 1
          %s403 = scalar_lea.vmem %s3, %s402
        $region36: #{tpu_custom_call.1} parent=31 // pred_fallthru
          _
        // Predicated region
        $region37: #{tpu_custom_call.1} parent=31 // pred_check
          %p404 = pneg %p131
        $region38: #{tpu_custom_call.1} parent=31 // pred_check_branch
          %406 = sbr.rel (%p404) target = $region40
        $region39: #{tpu_custom_call.1} parent=31 // pred_region
          %p407 = scmp.lt.s32.totalorder %s34, 1
          %s408 = scalar_select %p407, %s34, 1
          %s409 = scalar_lea.vmem %s4, %s408
        $region40: #{tpu_custom_call.1} parent=31 // pred_fallthru
          _
        // Predicated region
        $region41: #{tpu_custom_call.1} parent=31 // pred_check
          %p410 = pneg %p157
        $region42: #{tpu_custom_call.1} parent=31 // pred_check_branch
          %412 = sbr.rel (%p410) target = $region44
        $region43: #{tpu_custom_call.1} parent=31 // pred_region
          %p413 = scmp.lt.s32.totalorder %s34, 1
          %s414 = scalar_select %p413, %s34, 1
          %s415 = smul.addr %s414, 4
          %s416 = smul.addr %s415, 4
          %s417 = scalar_lea.vmem %s5, %s416
        $region44: #{tpu_custom_call.1} parent=31 // pred_fallthru
          _
        // Predicated region
        $region45: #{tpu_custom_call.1} parent=31 // pred_check
          %p418 = pneg %p183
        $region46: #{tpu_custom_call.1} parent=31 // pred_check_branch
          %420 = sbr.rel (%p418) target = $region48
        $region47: #{tpu_custom_call.1} parent=31 // pred_region
          %p421 = scmp.lt.s32.totalorder %s34, 1
          %s422 = scalar_select %p421, %s34, 1
          %s423 = smul.addr %s422, 4
          %s424 = smul.addr %s423, 4
          %s425 = scalar_lea.vmem %s6, %s424
        $region48: #{tpu_custom_call.1} parent=31 // pred_fallthru
          _
        // Predicated region
        $region49: #{tpu_custom_call.1} parent=31 // pred_check
          %p426 = pneg %p209
        $region50: #{tpu_custom_call.1} parent=31 // pred_check_branch
          %428 = sbr.rel (%p426) target = $region52
        $region51: #{tpu_custom_call.1} parent=31 // pred_region
          %p429 = scmp.lt.s32.totalorder %s34, 1
          %s430 = scalar_select %p429, %s34, 1
          %s431 = scalar_lea.vmem %s7, %s430
        $region52: #{tpu_custom_call.1} parent=31 // pred_fallthru
          _
        // Predicated region
        $region53: #{tpu_custom_call.1} parent=31 // pred_check
          %p432 = pneg %p235
        $region54: #{tpu_custom_call.1} parent=31 // pred_check_branch
          %434 = sbr.rel (%p432) target = $region56
        $region55: #{tpu_custom_call.1} parent=31 // pred_region
          %p435 = scmp.lt.s32.totalorder %s34, 1
          %s436 = scalar_select %p435, %s34, 1
          %s437 = scalar_lea.vmem %s8, %s436
        $region56: #{tpu_custom_call.1} parent=31 // pred_fallthru
          _
        // Predicated region
        $region57: #{tpu_custom_call.1} parent=31 // pred_check
          %p438 = pneg %p261
        $region58: #{tpu_custom_call.1} parent=31 // pred_check_branch
          %440 = sbr.rel (%p438) target = $region60
        $region59: #{tpu_custom_call.1} parent=31 // pred_region
          %p441 = scmp.lt.s32.totalorder %s34, 1
          %s442 = scalar_select %p441, %s34, 1
          %s443 = smul.addr %s442, 4
          %s444 = smul.addr %s443, 4
          %s445 = scalar_lea.vmem %s9, %s444
        $region60: #{tpu_custom_call.1} parent=31 // pred_fallthru
          _
        // Predicated region
        $region61: #{tpu_custom_call.1} parent=31 // pred_check
          %p446 = pneg %p287
        $region62: #{tpu_custom_call.1} parent=31 // pred_check_branch
          %448 = sbr.rel (%p446) target = $region64
        $region63: #{tpu_custom_call.1} parent=31 // pred_region
          %p449 = scmp.lt.s32.totalorder %s34, 1
          %s450 = scalar_select %p449, %s34, 1
          %s451 = smul.addr %s450, 16
          %s452 = smul.addr %s451, 4
          %s453 = scalar_lea.vmem %s10, %s452
        $region64: #{tpu_custom_call.1} parent=31 // pred_fallthru
          _
      $region32: #{tpu_custom_call.1} parent=5 // pred_fallthru
        _
      %p454 = scmp.le.s32.totalorder 1, %s26
      %p455 = scmp.lt.s32.totalorder %s26, 3
      %p456 = pnand %p454, %p455
      %p457 = pneg %p456
      // Predicated region
      $region65: #{tpu_custom_call.1} parent=5 // pred_check
        _
      $region66: #{tpu_custom_call.1} parent=5 // pred_check_branch
        %459 = sbr.rel (%p456) target = $region68
      $region67: #{tpu_custom_call.1} parent=5 // pred_region
        %s460 = ssub.s32 %s26, 1
        %s461 = smul.u32 2, %s35
        %p462 = scmp.lt.s32.totalorder %s461, 1
        %s463 = scalar_select %p462, %s461, 1
        %s464 = smul.addr %s463, 8
        %s465 = scalar_lea.vmem %s1, %s464
        %p466 = pneg %p64
        %p467 = pneg %p61
        %p468 = pneg %p85
        %p469 = pneg %p82
        %p470 = scmp.lt.s32.totalorder %s36, 1
        %s471 = scalar_select %p470, %s36, 1
        %s472 = scalar_lea.vmem %s3, %s471
        %p473 = pneg %p111
        %p474 = pneg %p108
        %p475 = scmp.lt.s32.totalorder %s36, 1
        %s476 = scalar_select %p475, %s36, 1
        %s477 = scalar_lea.vmem %s4, %s476
        %p478 = pneg %p137
        %p479 = pneg %p134
        %p480 = scmp.lt.s32.totalorder %s36, 1
        %s481 = scalar_select %p480, %s36, 1
        %s482 = smul.addr %s481, 4
        %s483 = smul.addr %s482, 4
        %s484 = scalar_lea.vmem %s5, %s483
        %p485 = pneg %p163
        %p486 = pneg %p160
        %p487 = scmp.lt.s32.totalorder %s36, 1
        %s488 = scalar_select %p487, %s36, 1
        %s489 = smul.addr %s488, 4
        %s490 = smul.addr %s489, 4
        %s491 = scalar_lea.vmem %s6, %s490
        %p492 = pneg %p189
        %p493 = pneg %p186
        %p494 = scmp.lt.s32.totalorder %s36, 1
        %s495 = scalar_select %p494, %s36, 1
        %s496 = scalar_lea.vmem %s7, %s495
        %p497 = pneg %p215
        %p498 = pneg %p212
        %p499 = scmp.lt.s32.totalorder %s36, 1
        %s500 = scalar_select %p499, %s36, 1
        %s501 = scalar_lea.vmem %s8, %s500
        %p502 = pneg %p241
        %p503 = pneg %p238
        %p504 = scmp.lt.s32.totalorder %s36, 1
        %s505 = scalar_select %p504, %s36, 1
        %s506 = smul.addr %s505, 4
        %s507 = smul.addr %s506, 4
        %s508 = scalar_lea.vmem %s9, %s507
        %p509 = pneg %p267
        %p510 = pneg %p264
        %p511 = scmp.lt.s32.totalorder %s36, 1
        %s512 = scalar_select %p511, %s36, 1
        %s513 = smul.addr %s512, 16
        %s514 = smul.addr %s513, 4
        %s515 = scalar_lea.vmem %s10, %s514
        %p516 = pneg %p293
        %p517 = pneg %p290
        %p518 = pneg %p314
        %p519 = pneg %p311
        %p520 = pneg %p335
        %p521 = pneg %p332
        %p522 = pneg %p361
        %p523 = pneg %p358
        %s524 = smul.u32 2, %s35
        %p525 = scmp.lt.s32.totalorder %s524, 1
        %s526 = scalar_select %p525, %s524, 1
        %s527 = smul.addr %s526, 8
        %s528 = scalar_lea.vmem %s1, %s527
        %s529 = smul.u32 2, %s35
        %p530 = scmp.lt.s32.totalorder %s36, 1
        %s531 = scalar_select %p530, %s36, 1
        %s532 = scalar_lea.vmem %s3, %s531
        %p533 = scmp.lt.s32.totalorder %s36, 1
        %s534 = scalar_select %p533, %s36, 1
        %s535 = scalar_lea.vmem %s4, %s534
        %p536 = scmp.lt.s32.totalorder %s36, 1
        %s537 = scalar_select %p536, %s36, 1
        %s538 = smul.addr %s537, 4
        %s539 = smul.addr %s538, 4
        %s540 = scalar_lea.vmem %s5, %s539
        %p541 = scmp.lt.s32.totalorder %s36, 1
        %s542 = scalar_select %p541, %s36, 1
        %s543 = smul.addr %s542, 4
        %s544 = smul.addr %s543, 4
        %s545 = scalar_lea.vmem %s6, %s544
        %p546 = scmp.lt.s32.totalorder %s36, 1
        %s547 = scalar_select %p546, %s36, 1
        %s548 = scalar_lea.vmem %s7, %s547
        %p549 = scmp.lt.s32.totalorder %s36, 1
        %s550 = scalar_select %p549, %s36, 1
        %s551 = scalar_lea.vmem %s8, %s550
        %p552 = scmp.lt.s32.totalorder %s36, 1
        %s553 = scalar_select %p552, %s36, 1
        %s554 = smul.addr %s553, 4
        %s555 = smul.addr %s554, 4
        %s556 = scalar_lea.vmem %s9, %s555
        %p557 = scmp.lt.s32.totalorder %s36, 1
        %s558 = scalar_select %p557, %s36, 1
        %s559 = smul.addr %s558, 16
        %s560 = smul.addr %s559, 4
        %s561 = scalar_lea.vmem %s10, %s560
        %s562 = smul.u32 2, %s35
        %s564 = smul.u32 %s35, 2
        %s565 = sld [smem:[#allocation4 + %s564]]
        %s566 = sadd.s32 %s564, 1
        %s567 = sld [smem:[#allocation4 + %s566]]
        %p568 = scmp.eq.s32.totalorder %s36, 0
        // Predicated region
        $region69: #{tpu_custom_call.1} parent=67 // pred_check
          %p569 = pneg %p568
        $region70: #{tpu_custom_call.1} parent=67 // pred_check_branch
          %571 = sbr.rel (%p569) target = $region72
        $region71: #{tpu_custom_call.1} parent=67 // pred_region
          %v572 = vlaneseq
          %v573 = vshrl.u32 %v572, 7
          %v574 = vld [vmem:[%s2] sm:$0xff]
          %v575 = vstv %s565
          %vm576 = vcmp.lt.s32.totalorder %v573, %v575
          %v577 = vsel %vm576, 1, 0
          %v578 = vcvt.s32.f32 %v577
          %v579 = vld [vmem:[%s528] sm:$0xff]
          %v580 = vmul.f32 %v579, %v578
          %v581 = vadd.f32 %v580, %v574
          %vm582 = vcmask 261120
          %583 = vst.msk [vmem:[#allocation2] sm:$0xff] %vm582, %v581
          %v584 = vstv %s567
          %vm585 = vcmp.lt.s32.totalorder %v573, %v584
          %v586 = vsel %vm585, 1, 0
          %v587 = vcvt.s32.f32 %v586
          %s588 = scalar_lea.vmem %s528, 8
          %v589 = vld [vmem:[%s588] sm:$0xff]
          %v590 = vmul.f32 %v589, %v587
          %v591 = vadd.f32 %v590, %v574
          %592 = vst.msk [vmem:[#allocation2 + $0x8] sm:$0xff] %vm582, %v591
        $region72: #{tpu_custom_call.1} parent=67 // pred_fallthru
          _
        %v593 = vlaneseq
        %v594 = vand.u32 %v593, 127
        %v595 = vstv %s565
        %vm596 = vcmp.ge.s32.totalorder %v594, %v595
        %v597 = vsel %vm596, 1, 0
        %v598 = vcvt.s32.f32 %v597
        %v599 = vmul.f32 %v598, -1e+09
        %v600 = vstv %s567
        %vm601 = vcmp.ge.s32.totalorder %v594, %v600
        %v602 = vsel %vm601, 1, 0
        %v603 = vcvt.s32.f32 %v602
        %v604 = vmul.f32 %v603, -1e+09
        %v605 = vld [vmem:[#allocation2] sm:$0xff]
        %v606 = vld [vmem:[#allocation2 + $0x8] sm:$0xff]
        %v607 = vld [vmem:[%s532] sm:$0x1]
        %v608 = vld [vmem:[%s535] sm:$0x1]
        %vm609 = vcmask 261120
        %v610 = vsel %vm609, %v605, 0.0
        %611 = vadd.xlane.f32.xlu0 %v610
        %v612 = vpop.xlane.xlu0 %611
        %v613 = vsel %vm609, %v606, 0.0
        %614 = vadd.xlane.f32.xlu0 %v613
        %v615 = vpop.xlane.xlu0 %614
        %v616 = vrcp.pop 32.0
        %v617 = vmul.f32 %v612, %v616
        %v618 = vmul.f32 %v615, %v616
        %v619 = vsub.f32 %v605, %v617
        %v620 = vsub.f32 %v606, %v618
        %v621 = vmul.f32 %v619, %v619
        %v622 = vmul.f32 %v620, %v620
        %v623 = vsel %vm609, %v621, 0.0
        %624 = vadd.xlane.f32.xlu0 %v623
        %v625 = vpop.xlane.xlu0 %624
        %v626 = vsel %vm609, %v622, 0.0
        %627 = vadd.xlane.f32.xlu0 %v626
        %v628 = vpop.xlane.xlu0 %627
        %v629 = vmul.f32 %v625, %v616
        %v630 = vmul.f32 %v628, %v616
        %v631 = vadd.f32 %v629, 1e-06
        %v632 = vadd.f32 %v630, 1e-06
        %v633 = vrsqrt.pop %v631
        %v634 = vrsqrt.pop %v632
        %v635 = vmul.f32 %v619, %v633
        %v636 = vmul.f32 %v620, %v634
        %v638 = vlaneseq
        %v639 = vshrl.u32 %v638, 7
        %v640 = vsub.s32 0, %v639
        %v641 = vrot.slane %v607, %v640
        %v643 = vmul.f32 %v635, %v641
        %v644 = vmul.f32 %v636, %v641
        %v646 = vlaneseq
        %v647 = vshrl.u32 %v646, 7
        %v648 = vsub.s32 0, %v647
        %v649 = vrot.slane %v608, %v648
        %v651 = vadd.f32 %v643, %v649
        %v652 = vadd.f32 %v644, %v649
        %v653 = vpack.c.bf16 %v652, %v651
        %v654 = vld [vmem:[%s540] sm:$0xf]
        %v655 = vld [vmem:[%s540 + $0x4] sm:$0xf]
        %v656 = vld [vmem:[%s540 + $0x8] sm:$0xf]
        %v657 = vld [vmem:[%s540 + $0xc] sm:$0xf]
        %v662 = vunpack.c.l.b16 %v654
        %v663 = vunpack.c.l.b16 %v655
        %v664 = vunpack.c.l.b16 %v656
        %v665 = vunpack.c.l.b16 %v657
        %v666 = vpack.c.b16 %v663, %v662
        %v667 = vpack.c.b16 %v665, %v664
        %v671 = vsel %vm609, %v653, 0
        %673 = vmatprep.subr.bf16.mxu0 0
        %674 = vmatpush1.bf16.msra.mxu0 %v666
        %675 = vmatprep.subr.bf16.mxu0 0
        %676 = vmatpush1.bf16.msra.mxu0 %v667
        %677 = vmatprep.subr.bf16.mxu0 0
        %678 = vmatpush1.bf16.msra.mxu0 0
        %679 = vmatprep.subr.bf16.mxu0 0
        %680 = vmatpush1.bf16.msra.mxu0 0
        %681 = vmatprep.subr.bf16.mxu0 0
        %682 = vmatpush1.bf16.msra.mxu0 0
        %683 = vmatprep.subr.bf16.mxu0 0
        %684 = vmatpush1.bf16.msra.mxu0 0
        %685 = vmatprep.subr.bf16.mxu0 0
        %686 = vmatpush1.bf16.msra.mxu0 0
        %687 = vmatprep.subr.bf16.mxu0 0
        %688 = vmatpush1.bf16.msra.mxu0 0
        %689 = vmatprep.subr.bf16.mxu0 0
        %690 = vmatpush1.bf16.msra.mxu0 0
        %691 = vmatprep.subr.bf16.mxu0 0
        %692 = vmatpush1.bf16.msra.mxu0 0
        %693 = vmatprep.subr.bf16.mxu0 0
        %694 = vmatpush1.bf16.msra.mxu0 0
        %695 = vmatprep.subr.bf16.mxu0 0
        %696 = vmatpush1.bf16.msra.mxu0 0
        %697 = vmatprep.subr.bf16.mxu0 0
        %698 = vmatpush1.bf16.msra.mxu0 0
        %699 = vmatprep.subr.bf16.mxu0 0
        %700 = vmatpush1.bf16.msra.mxu0 0
        %701 = vmatprep.subr.bf16.mxu0 0
        %702 = vmatpush1.bf16.msra.mxu0 0
        %703 = vmatprep.subr.bf16.mxu0 0
        %704 = vmatpush1.bf16.msra.mxu0 0
        %705 = vmatprep.mubr.bf16.mxu0 0
        %706 = vmatmul.mubr.bf16.gmra.mrb[0].mxu0 %v671
        %v707 = vpop.f32.mrb[0].mxu0
        %v708 = vadd.f32 0.0, %v707
        %v709 = vpop.f32.mrb[0].mxu0
        %v710 = vpop.f32.mrb[0].mxu0
        %v711 = vadd.f32 0.0, %v710
        %v712 = vpop.f32.mrb[0].mxu0
        %713 = vdwg.mxu0
        %v714 = vpack.c.bf16 %v708, %v708
        %v715 = vpack.c.bf16 %v711, %v711
        %v716 = vlaneseq
        %v717 = vshrl.u32 %v716, 7
        %v718 = vsub.s32 0, %v717
        %v719 = vrot.slane %v599, %v718
        %v720 = vlaneseq
        %v721 = vshrl.u32 %v720, 7
        %v722 = vsub.s32 0, %v721
        %v723 = vrot.slane %v604, %v722
        %725 = vrot.lane.b32.xlu0 %v714, 96
        %v726 = vpop.permute.xlu0 %725
        %vm727 = vcmask 64512
        %v729 = vsel %vm727, %v714, 0
        %v732 = vsel %vm727, %v726, 0
        %734 = vmatprep.subr.bf16.mxu0 0
        %735 = vmatpush1.bf16.xpose.msra.mxu0 %v732
        %736 = vmatprep.subr.bf16.mxu0 0
        %737 = vmatpush1.bf16.xpose.msra.mxu0 0
        %738 = vmatprep.subr.bf16.mxu0 0
        %739 = vmatpush1.bf16.xpose.msra.mxu0 0
        %740 = vmatprep.subr.bf16.mxu0 0
        %741 = vmatpush1.bf16.xpose.msra.mxu0 0
        %742 = vmatprep.subr.bf16.mxu0 0
        %743 = vmatpush1.bf16.xpose.msra.mxu0 0
        %744 = vmatprep.subr.bf16.mxu0 0
        %745 = vmatpush1.bf16.xpose.msra.mxu0 0
        %746 = vmatprep.subr.bf16.mxu0 0
        %747 = vmatpush1.bf16.xpose.msra.mxu0 0
        %748 = vmatprep.subr.bf16.mxu0 0
        %749 = vmatpush1.bf16.xpose.msra.mxu0 0
        %750 = vmatprep.subr.bf16.mxu0 0
        %751 = vmatpush1.bf16.xpose.msra.mxu0 0
        %752 = vmatprep.subr.bf16.mxu0 0
        %753 = vmatpush1.bf16.xpose.msra.mxu0 0
        %754 = vmatprep.subr.bf16.mxu0 0
        %755 = vmatpush1.bf16.xpose.msra.mxu0 0
        %756 = vmatprep.subr.bf16.mxu0 0
        %757 = vmatpush1.bf16.xpose.msra.mxu0 0
        %758 = vmatprep.subr.bf16.mxu0 0
        %759 = vmatpush1.bf16.xpose.msra.mxu0 0
        %760 = vmatprep.subr.bf16.mxu0 0
        %761 = vmatpush1.bf16.xpose.msra.mxu0 0
        %762 = vmatprep.subr.bf16.mxu0 0
        %763 = vmatpush1.bf16.xpose.msra.mxu0 0
        %764 = vmatprep.subr.bf16.mxu0 0
        %765 = vmatpush1.bf16.xpose.msra.mxu0 0
        %766 = vmatprep.mubr.bf16.mxu0 0
        %767 = vmatmul.mubr.bf16.gmra.mrb[0].mxu0 %v729
        %v768 = vpop.f32.mrb[0].mxu0
        %v769 = vadd.f32 %v719, %v768
        %v770 = vpop.f32.mrb[0].mxu0
        %v771 = vpop.f32.mrb[0].mxu0
        %v772 = vpop.f32.mrb[0].mxu0
        %773 = vdwg.mxu0
        %775 = vrot.lane.b32.xlu0 %v715, 96
        %v776 = vpop.permute.xlu0 %775
        %v778 = vsel %vm727, %v715, 0
        %v781 = vsel %vm727, %v776, 0
        %783 = vmatprep.subr.bf16.mxu0 0
        %784 = vmatpush1.bf16.xpose.msra.mxu0 %v781
        %785 = vmatprep.subr.bf16.mxu0 0
        %786 = vmatpush1.bf16.xpose.msra.mxu0 0
        %787 = vmatprep.subr.bf16.mxu0 0
        %788 = vmatpush1.bf16.xpose.msra.mxu0 0
        %789 = vmatprep.subr.bf16.mxu0 0
        %790 = vmatpush1.bf16.xpose.msra.mxu0 0
        %791 = vmatprep.subr.bf16.mxu0 0
        %792 = vmatpush1.bf16.xpose.msra.mxu0 0
        %793 = vmatprep.subr.bf16.mxu0 0
        %794 = vmatpush1.bf16.xpose.msra.mxu0 0
        %795 = vmatprep.subr.bf16.mxu0 0
        %796 = vmatpush1.bf16.xpose.msra.mxu0 0
        %797 = vmatprep.subr.bf16.mxu0 0
        %798 = vmatpush1.bf16.xpose.msra.mxu0 0
        %799 = vmatprep.subr.bf16.mxu0 0
        %800 = vmatpush1.bf16.xpose.msra.mxu0 0
        %801 = vmatprep.subr.bf16.mxu0 0
        %802 = vmatpush1.bf16.xpose.msra.mxu0 0
        %803 = vmatprep.subr.bf16.mxu0 0
        %804 = vmatpush1.bf16.xpose.msra.mxu0 0
        %805 = vmatprep.subr.bf16.mxu0 0
        %806 = vmatpush1.bf16.xpose.msra.mxu0 0
        %807 = vmatprep.subr.bf16.mxu0 0
        %808 = vmatpush1.bf16.xpose.msra.mxu0 0
        %809 = vmatprep.subr.bf16.mxu0 0
        %810 = vmatpush1.bf16.xpose.msra.mxu0 0
        %811 = vmatprep.subr.bf16.mxu0 0
        %812 = vmatpush1.bf16.xpose.msra.mxu0 0
        %813 = vmatprep.subr.bf16.mxu0 0
        %814 = vmatpush1.bf16.xpose.msra.mxu0 0
        %815 = vmatprep.mubr.bf16.mxu0 0
        %816 = vmatmul.mubr.bf16.gmra.mrb[0].mxu0 %v778
        %v817 = vpop.f32.mrb[0].mxu0
        %v818 = vadd.f32 %v723, %v817
        %v819 = vpop.f32.mrb[0].mxu0
        %v820 = vpop.f32.mrb[0].mxu0
        %v821 = vpop.f32.mrb[0].mxu0
        %822 = vdwg.mxu0
        %v823 = vsel %vm727, %v769, -inf
        %824 = vmax.xlane.f32.xlu0 %v823
        %v825 = vpop.xlane.xlu0 %824
        %v826 = vsel %vm727, %v818, -inf
        %827 = vmax.xlane.f32.xlu0 %v826
        %v828 = vpop.xlane.xlu0 %827
        %v829 = vsub.f32 %v769, %v825
        %v830 = vsub.f32 %v818, %v828
        %v831 = vmul.f32 %v829, 1.442695
        %v832 = vpow.pop %v831
        %v833 = vmul.f32 %v830, 1.442695
        %v834 = vpow.pop %v833
        %v835 = vsel %vm727, %v832, 0.0
        %836 = vadd.xlane.f32.xlu0 %v835
        %v837 = vpop.xlane.xlu0 %836
        %v838 = vsel %vm727, %v834, 0.0
        %839 = vadd.xlane.f32.xlu0 %v838
        %v840 = vpop.xlane.xlu0 %839
        %v841 = vmax.f32 %v837, 1e-30
        %v842 = vmax.f32 %v840, 1e-30
        %v843 = vrcp.pop %v841
        %v844 = vrcp.pop %v842
        %v845 = vmul.f32 %v832, %v843
        %v846 = vmul.f32 %v834, %v844
        %v847 = vpack.c.bf16 %v845, %v845
        %v848 = vpack.c.bf16 %v846, %v846
        %849 = vrot.lane.b32.xlu0 %v714, 64
        %v850 = vpop.permute.xlu0 %849
        %v852 = vsel %vm727, %v847, 0
        %vm854 = vcmask 1043456
        %v856 = vsel %vm854, %v850, 0
        %858 = vmatprep.subr.bf16.mxu0 0
        %859 = vmatpush1.bf16.msra.mxu0 %v856
        %860 = vmatprep.subr.bf16.mxu0 0
        %861 = vmatpush1.bf16.msra.mxu0 0
        %862 = vmatprep.subr.bf16.mxu0 0
        %863 = vmatpush1.bf16.msra.mxu0 0
        %864 = vmatprep.subr.bf16.mxu0 0
        %865 = vmatpush1.bf16.msra.mxu0 0
        %866 = vmatprep.subr.bf16.mxu0 0
        %867 = vmatpush1.bf16.msra.mxu0 0
        %868 = vmatprep.subr.bf16.mxu0 0
        %869 = vmatpush1.bf16.msra.mxu0 0
        %870 = vmatprep.subr.bf16.mxu0 0
        %871 = vmatpush1.bf16.msra.mxu0 0
        %872 = vmatprep.subr.bf16.mxu0 0
        %873 = vmatpush1.bf16.msra.mxu0 0
        %874 = vmatprep.subr.bf16.mxu0 0
        %875 = vmatpush1.bf16.msra.mxu0 0
        %876 = vmatprep.subr.bf16.mxu0 0
        %877 = vmatpush1.bf16.msra.mxu0 0
        %878 = vmatprep.subr.bf16.mxu0 0
        %879 = vmatpush1.bf16.msra.mxu0 0
        %880 = vmatprep.subr.bf16.mxu0 0
        %881 = vmatpush1.bf16.msra.mxu0 0
        %882 = vmatprep.subr.bf16.mxu0 0
        %883 = vmatpush1.bf16.msra.mxu0 0
        %884 = vmatprep.subr.bf16.mxu0 0
        %885 = vmatpush1.bf16.msra.mxu0 0
        %886 = vmatprep.subr.bf16.mxu0 0
        %887 = vmatpush1.bf16.msra.mxu0 0
        %888 = vmatprep.subr.bf16.mxu0 0
        %889 = vmatpush1.bf16.msra.mxu0 0
        %890 = vmatprep.mubr.bf16.mxu0 0
        %891 = vmatmul.mubr.bf16.gmra.mrb[0].mxu0 %v852
        %v892 = vpop.f32.mrb[0].mxu0
        %v893 = vadd.f32 0.0, %v892
        %v894 = vpop.f32.mrb[0].mxu0
        %v895 = vpop.f32.mrb[0].mxu0
        %v896 = vpop.f32.mrb[0].mxu0
        %897 = vdwg.mxu0
        %898 = vrot.lane.b32.xlu0 %v715, 64
        %v899 = vpop.permute.xlu0 %898
        %v901 = vsel %vm727, %v848, 0
        %v904 = vsel %vm854, %v899, 0
        %906 = vmatprep.subr.bf16.mxu0 0
        %907 = vmatpush1.bf16.msra.mxu0 %v904
        %908 = vmatprep.subr.bf16.mxu0 0
        %909 = vmatpush1.bf16.msra.mxu0 0
        %910 = vmatprep.subr.bf16.mxu0 0
        %911 = vmatpush1.bf16.msra.mxu0 0
        %912 = vmatprep.subr.bf16.mxu0 0
        %913 = vmatpush1.bf16.msra.mxu0 0
        %914 = vmatprep.subr.bf16.mxu0 0
        %915 = vmatpush1.bf16.msra.mxu0 0
        %916 = vmatprep.subr.bf16.mxu0 0
        %917 = vmatpush1.bf16.msra.mxu0 0
        %918 = vmatprep.subr.bf16.mxu0 0
        %919 = vmatpush1.bf16.msra.mxu0 0
        %920 = vmatprep.subr.bf16.mxu0 0
        %921 = vmatpush1.bf16.msra.mxu0 0
        %922 = vmatprep.subr.bf16.mxu0 0
        %923 = vmatpush1.bf16.msra.mxu0 0
        %924 = vmatprep.subr.bf16.mxu0 0
        %925 = vmatpush1.bf16.msra.mxu0 0
        %926 = vmatprep.subr.bf16.mxu0 0
        %927 = vmatpush1.bf16.msra.mxu0 0
        %928 = vmatprep.subr.bf16.mxu0 0
        %929 = vmatpush1.bf16.msra.mxu0 0
        %930 = vmatprep.subr.bf16.mxu0 0
        %931 = vmatpush1.bf16.msra.mxu0 0
        %932 = vmatprep.subr.bf16.mxu0 0
        %933 = vmatpush1.bf16.msra.mxu0 0
        %934 = vmatprep.subr.bf16.mxu0 0
        %935 = vmatpush1.bf16.msra.mxu0 0
        %936 = vmatprep.subr.bf16.mxu0 0
        %937 = vmatpush1.bf16.msra.mxu0 0
        %938 = vmatprep.mubr.bf16.mxu0 0
        %939 = vmatmul.mubr.bf16.gmra.mrb[0].mxu0 %v901
        %v940 = vpop.f32.mrb[0].mxu0
        %v941 = vadd.f32 0.0, %v940
        %v942 = vpop.f32.mrb[0].mxu0
        %v943 = vpop.f32.mrb[0].mxu0
        %v944 = vpop.f32.mrb[0].mxu0
        %945 = vdwg.mxu0
        %946 = vrot.lane.b32.xlu0 %v714, 120
        %v947 = vpop.permute.xlu0 %946
        %948 = vrot.lane.b32.xlu0 %v714, 88
        %v949 = vpop.permute.xlu0 %948
        %v951 = vsel %vm727, %v947, 0
        %v954 = vsel %vm727, %v949, 0
        %956 = vmatprep.subr.bf16.mxu0 0
        %957 = vmatpush1.bf16.xpose.msra.mxu0 %v954
        %958 = vmatprep.subr.bf16.mxu0 0
        %959 = vmatpush1.bf16.xpose.msra.mxu0 0
        %960 = vmatprep.subr.bf16.mxu0 0
        %961 = vmatpush1.bf16.xpose.msra.mxu0 0
        %962 = vmatprep.subr.bf16.mxu0 0
        %963 = vmatpush1.bf16.xpose.msra.mxu0 0
        %964 = vmatprep.subr.bf16.mxu0 0
        %965 = vmatpush1.bf16.xpose.msra.mxu0 0
        %966 = vmatprep.subr.bf16.mxu0 0
        %967 = vmatpush1.bf16.xpose.msra.mxu0 0
        %968 = vmatprep.subr.bf16.mxu0 0
        %969 = vmatpush1.bf16.xpose.msra.mxu0 0
        %970 = vmatprep.subr.bf16.mxu0 0
        %971 = vmatpush1.bf16.xpose.msra.mxu0 0
        %972 = vmatprep.subr.bf16.mxu0 0
        %973 = vmatpush1.bf16.xpose.msra.mxu0 0
        %974 = vmatprep.subr.bf16.mxu0 0
        %975 = vmatpush1.bf16.xpose.msra.mxu0 0
        %976 = vmatprep.subr.bf16.mxu0 0
        %977 = vmatpush1.bf16.xpose.msra.mxu0 0
        %978 = vmatprep.subr.bf16.mxu0 0
        %979 = vmatpush1.bf16.xpose.msra.mxu0 0
        %980 = vmatprep.subr.bf16.mxu0 0
        %981 = vmatpush1.bf16.xpose.msra.mxu0 0
        %982 = vmatprep.subr.bf16.mxu0 0
        %983 = vmatpush1.bf16.xpose.msra.mxu0 0
        %984 = vmatprep.subr.bf16.mxu0 0
        %985 = vmatpush1.bf16.xpose.msra.mxu0 0
        %986 = vmatprep.subr.bf16.mxu0 0
        %987 = vmatpush1.bf16.xpose.msra.mxu0 0
        %988 = vmatprep.mubr.bf16.mxu0 0
        %989 = vmatmul.mubr.bf16.gmra.mrb[0].mxu0 %v951
        %v990 = vpop.f32.mrb[0].mxu0
        %v991 = vadd.f32 %v719, %v990
        %v992 = vpop.f32.mrb[0].mxu0
        %v993 = vpop.f32.mrb[0].mxu0
        %v994 = vpop.f32.mrb[0].mxu0
        %995 = vdwg.mxu0
        %996 = vrot.lane.b32.xlu0 %v715, 120
        %v997 = vpop.permute.xlu0 %996
        %998 = vrot.lane.b32.xlu0 %v715, 88
        %v999 = vpop.permute.xlu0 %998
        %v1001 = vsel %vm727, %v997, 0
        %v1004 = vsel %vm727, %v999, 0
        %1006 = vmatprep.subr.bf16.mxu0 0
        %1007 = vmatpush1.bf16.xpose.msra.mxu0 %v1004
        %1008 = vmatprep.subr.bf16.mxu0 0
        %1009 = vmatpush1.bf16.xpose.msra.mxu0 0
        %1010 = vmatprep.subr.bf16.mxu0 0
        %1011 = vmatpush1.bf16.xpose.msra.mxu0 0
        %1012 = vmatprep.subr.bf16.mxu0 0
        %1013 = vmatpush1.bf16.xpose.msra.mxu0 0
        %1014 = vmatprep.subr.bf16.mxu0 0
        %1015 = vmatpush1.bf16.xpose.msra.mxu0 0
        %1016 = vmatprep.subr.bf16.mxu0 0
        %1017 = vmatpush1.bf16.xpose.msra.mxu0 0
        %1018 = vmatprep.subr.bf16.mxu0 0
        %1019 = vmatpush1.bf16.xpose.msra.mxu0 0
        %1020 = vmatprep.subr.bf16.mxu0 0
        %1021 = vmatpush1.bf16.xpose.msra.mxu0 0
        %1022 = vmatprep.subr.bf16.mxu0 0
        %1023 = vmatpush1.bf16.xpose.msra.mxu0 0
        %1024 = vmatprep.subr.bf16.mxu0 0
        %1025 = vmatpush1.bf16.xpose.msra.mxu0 0
        %1026 = vmatprep.subr.bf16.mxu0 0
        %1027 = vmatpush1.bf16.xpose.msra.mxu0 0
        %1028 = vmatprep.subr.bf16.mxu0 0
        %1029 = vmatpush1.bf16.xpose.msra.mxu0 0
        %1030 = vmatprep.subr.bf16.mxu0 0
        %1031 = vmatpush1.bf16.xpose.msra.mxu0 0
        %1032 = vmatprep.subr.bf16.mxu0 0
        %1033 = vmatpush1.bf16.xpose.msra.mxu0 0
        %1034 = vmatprep.subr.bf16.mxu0 0
        %1035 = vmatpush1.bf16.xpose.msra.mxu0 0
        %1036 = vmatprep.subr.bf16.mxu0 0
        %1037 = vmatpush1.bf16.xpose.msra.mxu0 0
        %1038 = vmatprep.mubr.bf16.mxu0 0
        %1039 = vmatmul.mubr.bf16.gmra.mrb[0].mxu0 %v1001
        %v1040 = vpop.f32.mrb[0].mxu0
        %v1041 = vadd.f32 %v723, %v1040
        %v1042 = vpop.f32.mrb[0].mxu0
        %v1043 = vpop.f32.mrb[0].mxu0
        %v1044 = vpop.f32.mrb[0].mxu0
        %1045 = vdwg.mxu0
        %v1046 = vsel %vm727, %v991, -inf
        %1047 = vmax.xlane.f32.xlu0 %v1046
        %v1048 = vpop.xlane.xlu0 %1047
        %v1049 = vsel %vm727, %v1041, -inf
        %1050 = vmax.xlane.f32.xlu0 %v1049
        %v1051 = vpop.xlane.xlu0 %1050
        %v1052 = vsub.f32 %v991, %v1048
        %v1053 = vsub.f32 %v1041, %v1051
        %v1054 = vmul.f32 %v1052, 1.442695
        %v1055 = vpow.pop %v1054
        %v1056 = vmul.f32 %v1053, 1.442695
        %v1057 = vpow.pop %v1056
        %v1058 = vsel %vm727, %v1055, 0.0
        %1059 = vadd.xlane.f32.xlu0 %v1058
        %v1060 = vpop.xlane.xlu0 %1059
        %v1061 = vsel %vm727, %v1057, 0.0
        %1062 = vadd.xlane.f32.xlu0 %v1061
        %v1063 = vpop.xlane.xlu0 %1062
        %v1064 = vmax.f32 %v1060, 1e-30
        %v1065 = vmax.f32 %v1063, 1e-30
        %v1066 = vrcp.pop %v1064
        %v1067 = vrcp.pop %v1065
        %v1068 = vmul.f32 %v1055, %v1066
        %v1069 = vmul.f32 %v1057, %v1067
        %v1070 = vpack.c.bf16 %v1068, %v1068
        %v1071 = vpack.c.bf16 %v1069, %v1069
        %1072 = vrot.lane.b32.xlu0 %v714, 56
        %v1073 = vpop.permute.xlu0 %1072
        %v1075 = vsel %vm727, %v1070, 0
        %v1078 = vsel %vm854, %v1073, 0
        %1080 = vmatprep.subr.bf16.mxu0 0
        %1081 = vmatpush1.bf16.msra.mxu0 %v1078
        %1082 = vmatprep.subr.bf16.mxu0 0
        %1083 = vmatpush1.bf16.msra.mxu0 0
        %1084 = vmatprep.subr.bf16.mxu0 0
        %1085 = vmatpush1.bf16.msra.mxu0 0
        %1086 = vmatprep.subr.bf16.mxu0 0
        %1087 = vmatpush1.bf16.msra.mxu0 0
        %1088 = vmatprep.subr.bf16.mxu0 0
        %1089 = vmatpush1.bf16.msra.mxu0 0
        %1090 = vmatprep.subr.bf16.mxu0 0
        %1091 = vmatpush1.bf16.msra.mxu0 0
        %1092 = vmatprep.subr.bf16.mxu0 0
        %1093 = vmatpush1.bf16.msra.mxu0 0
        %1094 = vmatprep.subr.bf16.mxu0 0
        %1095 = vmatpush1.bf16.msra.mxu0 0
        %1096 = vmatprep.subr.bf16.mxu0 0
        %1097 = vmatpush1.bf16.msra.mxu0 0
        %1098 = vmatprep.subr.bf16.mxu0 0
        %1099 = vmatpush1.bf16.msra.mxu0 0
        %1100 = vmatprep.subr.bf16.mxu0 0
        %1101 = vmatpush1.bf16.msra.mxu0 0
        %1102 = vmatprep.subr.bf16.mxu0 0
        %1103 = vmatpush1.bf16.msra.mxu0 0
        %1104 = vmatprep.subr.bf16.mxu0 0
        %1105 = vmatpush1.bf16.msra.mxu0 0
        %1106 = vmatprep.subr.bf16.mxu0 0
        %1107 = vmatpush1.bf16.msra.mxu0 0
        %1108 = vmatprep.subr.bf16.mxu0 0
        %1109 = vmatpush1.bf16.msra.mxu0 0
        %1110 = vmatprep.subr.bf16.mxu0 0
        %1111 = vmatpush1.bf16.msra.mxu0 0
        %1112 = vmatprep.mubr.bf16.mxu0 0
        %1113 = vmatmul.mubr.bf16.gmra.mrb[0].mxu0 %v1075
        %v1114 = vpop.f32.mrb[0].mxu0
        %v1115 = vadd.f32 0.0, %v1114
        %v1116 = vpop.f32.mrb[0].mxu0
        %v1117 = vpop.f32.mrb[0].mxu0
        %v1118 = vpop.f32.mrb[0].mxu0
        %1119 = vdwg.mxu0
        %1120 = vrot.lane.b32.xlu0 %v715, 56
        %v1121 = vpop.permute.xlu0 %1120
        %v1123 = vsel %vm727, %v1071, 0
        %v1126 = vsel %vm854, %v1121, 0
        %1128 = vmatprep.subr.bf16.mxu0 0
        %1129 = vmatpush1.bf16.msra.mxu0 %v1126
        %1130 = vmatprep.subr.bf16.mxu0 0
        %1131 = vmatpush1.bf16.msra.mxu0 0
        %1132 = vmatprep.subr.bf16.mxu0 0
        %1133 = vmatpush1.bf16.msra.mxu0 0
        %1134 = vmatprep.subr.bf16.mxu0 0
        %1135 = vmatpush1.bf16.msra.mxu0 0
        %1136 = vmatprep.subr.bf16.mxu0 0
        %1137 = vmatpush1.bf16.msra.mxu0 0
        %1138 = vmatprep.subr.bf16.mxu0 0
        %1139 = vmatpush1.bf16.msra.mxu0 0
        %1140 = vmatprep.subr.bf16.mxu0 0
        %1141 = vmatpush1.bf16.msra.mxu0 0
        %1142 = vmatprep.subr.bf16.mxu0 0
        %1143 = vmatpush1.bf16.msra.mxu0 0
        %1144 = vmatprep.subr.bf16.mxu0 0
        %1145 = vmatpush1.bf16.msra.mxu0 0
        %1146 = vmatprep.subr.bf16.mxu0 0
        %1147 = vmatpush1.bf16.msra.mxu0 0
        %1148 = vmatprep.subr.bf16.mxu0 0
        %1149 = vmatpush1.bf16.msra.mxu0 0
        %1150 = vmatprep.subr.bf16.mxu0 0
        %1151 = vmatpush1.bf16.msra.mxu0 0
        %1152 = vmatprep.subr.bf16.mxu0 0
        %1153 = vmatpush1.bf16.msra.mxu0 0
        %1154 = vmatprep.subr.bf16.mxu0 0
        %1155 = vmatpush1.bf16.msra.mxu0 0
        %1156 = vmatprep.subr.bf16.mxu0 0
        %1157 = vmatpush1.bf16.msra.mxu0 0
        %1158 = vmatprep.subr.bf16.mxu0 0
        %1159 = vmatpush1.bf16.msra.mxu0 0
        %1160 = vmatprep.mubr.bf16.mxu0 0
        %1161 = vmatmul.mubr.bf16.gmra.mrb[0].mxu0 %v1123
        %v1162 = vpop.f32.mrb[0].mxu0
        %v1163 = vadd.f32 0.0, %v1162
        %v1164 = vpop.f32.mrb[0].mxu0
        %v1165 = vpop.f32.mrb[0].mxu0
        %v1166 = vpop.f32.mrb[0].mxu0
        %1167 = vdwg.mxu0
        %1168 = vrot.lane.b32.xlu0 %v714, 112
        %v1169 = vpop.permute.xlu0 %1168
        %1170 = vrot.lane.b32.xlu0 %v714, 80
        %v1171 = vpop.permute.xlu0 %1170
        %v1173 = vsel %vm727, %v1169, 0
        %v1176 = vsel %vm727, %v1171, 0
        %1178 = vmatprep.subr.bf16.mxu0 0
        %1179 = vmatpush1.bf16.xpose.msra.mxu0 %v1176
        %1180 = vmatprep.subr.bf16.mxu0 0
        %1181 = vmatpush1.bf16.xpose.msra.mxu0 0
        %1182 = vmatprep.subr.bf16.mxu0 0
        %1183 = vmatpush1.bf16.xpose.msra.mxu0 0
        %1184 = vmatprep.subr.bf16.mxu0 0
        %1185 = vmatpush1.bf16.xpose.msra.mxu0 0
        %1186 = vmatprep.subr.bf16.mxu0 0
        %1187 = vmatpush1.bf16.xpose.msra.mxu0 0
        %1188 = vmatprep.subr.bf16.mxu0 0
        %1189 = vmatpush1.bf16.xpose.msra.mxu0 0
        %1190 = vmatprep.subr.bf16.mxu0 0
        %1191 = vmatpush1.bf16.xpose.msra.mxu0 0
        %1192 = vmatprep.subr.bf16.mxu0 0
        %1193 = vmatpush1.bf16.xpose.msra.mxu0 0
        %1194 = vmatprep.subr.bf16.mxu0 0
        %1195 = vmatpush1.bf16.xpose.msra.mxu0 0
        %1196 = vmatprep.subr.bf16.mxu0 0
        %1197 = vmatpush1.bf16.xpose.msra.mxu0 0
        %1198 = vmatprep.subr.bf16.mxu0 0
        %1199 = vmatpush1.bf16.xpose.msra.mxu0 0
        %1200 = vmatprep.subr.bf16.mxu0 0
        %1201 = vmatpush1.bf16.xpose.msra.mxu0 0
        %1202 = vmatprep.subr.bf16.mxu0 0
        %1203 = vmatpush1.bf16.xpose.msra.mxu0 0
        %1204 = vmatprep.subr.bf16.mxu0 0
        %1205 = vmatpush1.bf16.xpose.msra.mxu0 0
        %1206 = vmatprep.subr.bf16.mxu0 0
        %1207 = vmatpush1.bf16.xpose.msra.mxu0 0
        %1208 = vmatprep.subr.bf16.mxu0 0
        %1209 = vmatpush1.bf16.xpose.msra.mxu0 0
        %1210 = vmatprep.mubr.bf16.mxu0 0
        %1211 = vmatmul.mubr.bf16.gmra.mrb[0].mxu0 %v1173
        %v1212 = vpop.f32.mrb[0].mxu0
        %v1213 = vadd.f32 %v719, %v1212
        %v1214 = vpop.f32.mrb[0].mxu0
        %v1215 = vpop.f32.mrb[0].mxu0
        %v1216 = vpop.f32.mrb[0].mxu0
        %1217 = vdwg.mxu0
        %1218 = vrot.lane.b32.xlu0 %v715, 112
        %v1219 = vpop.permute.xlu0 %1218
        %1220 = vrot.lane.b32.xlu0 %v715, 80
        %v1221 = vpop.permute.xlu0 %1220
        %v1223 = vsel %vm727, %v1219, 0
        %v1226 = vsel %vm727, %v1221, 0
        %1228 = vmatprep.subr.bf16.mxu0 0
        %1229 = vmatpush1.bf16.xpose.msra.mxu0 %v1226
        %1230 = vmatprep.subr.bf16.mxu0 0
        %1231 = vmatpush1.bf16.xpose.msra.mxu0 0
        %1232 = vmatprep.subr.bf16.mxu0 0
        %1233 = vmatpush1.bf16.xpose.msra.mxu0 0
        %1234 = vmatprep.subr.bf16.mxu0 0
        %1235 = vmatpush1.bf16.xpose.msra.mxu0 0
        %1236 = vmatprep.subr.bf16.mxu0 0
        %1237 = vmatpush1.bf16.xpose.msra.mxu0 0
        %1238 = vmatprep.subr.bf16.mxu0 0
        %1239 = vmatpush1.bf16.xpose.msra.mxu0 0
        %1240 = vmatprep.subr.bf16.mxu0 0
        %1241 = vmatpush1.bf16.xpose.msra.mxu0 0
        %1242 = vmatprep.subr.bf16.mxu0 0
        %1243 = vmatpush1.bf16.xpose.msra.mxu0 0
        %1244 = vmatprep.subr.bf16.mxu0 0
        %1245 = vmatpush1.bf16.xpose.msra.mxu0 0
        %1246 = vmatprep.subr.bf16.mxu0 0
        %1247 = vmatpush1.bf16.xpose.msra.mxu0 0
        %1248 = vmatprep.subr.bf16.mxu0 0
        %1249 = vmatpush1.bf16.xpose.msra.mxu0 0
        %1250 = vmatprep.subr.bf16.mxu0 0
        %1251 = vmatpush1.bf16.xpose.msra.mxu0 0
        %1252 = vmatprep.subr.bf16.mxu0 0
        %1253 = vmatpush1.bf16.xpose.msra.mxu0 0
        %1254 = vmatprep.subr.bf16.mxu0 0
        %1255 = vmatpush1.bf16.xpose.msra.mxu0 0
        %1256 = vmatprep.subr.bf16.mxu0 0
        %1257 = vmatpush1.bf16.xpose.msra.mxu0 0
        %1258 = vmatprep.subr.bf16.mxu0 0
        %1259 = vmatpush1.bf16.xpose.msra.mxu0 0
        %1260 = vmatprep.mubr.bf16.mxu0 0
        %1261 = vmatmul.mubr.bf16.gmra.mrb[0].mxu0 %v1223
        %v1262 = vpop.f32.mrb[0].mxu0
        %v1263 = vadd.f32 %v723, %v1262
        %v1264 = vpop.f32.mrb[0].mxu0
        %v1265 = vpop.f32.mrb[0].mxu0
        %v1266 = vpop.f32.mrb[0].mxu0
        %1267 = vdwg.mxu0
        %v1268 = vsel %vm727, %v1213, -inf
        %1269 = vmax.xlane.f32.xlu0 %v1268
        %v1270 = vpop.xlane.xlu0 %1269
        %v1271 = vsel %vm727, %v1263, -inf
        %1272 = vmax.xlane.f32.xlu0 %v1271
        %v1273 = vpop.xlane.xlu0 %1272
        %v1274 = vsub.f32 %v1213, %v1270
        %v1275 = vsub.f32 %v1263, %v1273
        %v1276 = vmul.f32 %v1274, 1.442695
        %v1277 = vpow.pop %v1276
        %v1278 = vmul.f32 %v1275, 1.442695
        %v1279 = vpow.pop %v1278
        %v1280 = vsel %vm727, %v1277, 0.0
        %1281 = vadd.xlane.f32.xlu0 %v1280
        %v1282 = vpop.xlane.xlu0 %1281
        %v1283 = vsel %vm727, %v1279, 0.0
        %1284 = vadd.xlane.f32.xlu0 %v1283
        %v1285 = vpop.xlane.xlu0 %1284
        %v1286 = vmax.f32 %v1282, 1e-30
        %v1287 = vmax.f32 %v1285, 1e-30
        %v1288 = vrcp.pop %v1286
        %v1289 = vrcp.pop %v1287
        %v1290 = vmul.f32 %v1277, %v1288
        %v1291 = vmul.f32 %v1279, %v1289
        %v1292 = vpack.c.bf16 %v1290, %v1290
        %v1293 = vpack.c.bf16 %v1291, %v1291
        %1294 = vrot.lane.b32.xlu0 %v714, 48
        %v1295 = vpop.permute.xlu0 %1294
        %v1297 = vsel %vm727, %v1292, 0
        %v1300 = vsel %vm854, %v1295, 0
        %1302 = vmatprep.subr.bf16.mxu0 0
        %1303 = vmatpush1.bf16.msra.mxu0 %v1300
        %1304 = vmatprep.subr.bf16.mxu0 0
        %1305 = vmatpush1.bf16.msra.mxu0 0
        %1306 = vmatprep.subr.bf16.mxu0 0
        %1307 = vmatpush1.bf16.msra.mxu0 0
        %1308 = vmatprep.subr.bf16.mxu0 0
        %1309 = vmatpush1.bf16.msra.mxu0 0
        %1310 = vmatprep.subr.bf16.mxu0 0
        %1311 = vmatpush1.bf16.msra.mxu0 0
        %1312 = vmatprep.subr.bf16.mxu0 0
        %1313 = vmatpush1.bf16.msra.mxu0 0
        %1314 = vmatprep.subr.bf16.mxu0 0
        %1315 = vmatpush1.bf16.msra.mxu0 0
        %1316 = vmatprep.subr.bf16.mxu0 0
        %1317 = vmatpush1.bf16.msra.mxu0 0
        %1318 = vmatprep.subr.bf16.mxu0 0
        %1319 = vmatpush1.bf16.msra.mxu0 0
        %1320 = vmatprep.subr.bf16.mxu0 0
        %1321 = vmatpush1.bf16.msra.mxu0 0
        %1322 = vmatprep.subr.bf16.mxu0 0
        %1323 = vmatpush1.bf16.msra.mxu0 0
        %1324 = vmatprep.subr.bf16.mxu0 0
        %1325 = vmatpush1.bf16.msra.mxu0 0
        %1326 = vmatprep.subr.bf16.mxu0 0
        %1327 = vmatpush1.bf16.msra.mxu0 0
        %1328 = vmatprep.subr.bf16.mxu0 0
        %1329 = vmatpush1.bf16.msra.mxu0 0
        %1330 = vmatprep.subr.bf16.mxu0 0
        %1331 = vmatpush1.bf16.msra.mxu0 0
        %1332 = vmatprep.subr.bf16.mxu0 0
        %1333 = vmatpush1.bf16.msra.mxu0 0
        %1334 = vmatprep.mubr.bf16.mxu0 0
        %1335 = vmatmul.mubr.bf16.gmra.mrb[0].mxu0 %v1297
        %v1336 = vpop.f32.mrb[0].mxu0
        %v1337 = vadd.f32 0.0, %v1336
        %v1338 = vpop.f32.mrb[0].mxu0
        %v1339 = vpop.f32.mrb[0].mxu0
        %v1340 = vpop.f32.mrb[0].mxu0
        %1341 = vdwg.mxu0
        %1342 = vrot.lane.b32.xlu0 %v715, 48
        %v1343 = vpop.permute.xlu0 %1342
        %v1345 = vsel %vm727, %v1293, 0
        %v1348 = vsel %vm854, %v1343, 0
        %1350 = vmatprep.subr.bf16.mxu0 0
        %1351 = vmatpush1.bf16.msra.mxu0 %v1348
        %1352 = vmatprep.subr.bf16.mxu0 0
        %1353 = vmatpush1.bf16.msra.mxu0 0
        %1354 = vmatprep.subr.bf16.mxu0 0
        %1355 = vmatpush1.bf16.msra.mxu0 0
        %1356 = vmatprep.subr.bf16.mxu0 0
        %1357 = vmatpush1.bf16.msra.mxu0 0
        %1358 = vmatprep.subr.bf16.mxu0 0
        %1359 = vmatpush1.bf16.msra.mxu0 0
        %1360 = vmatprep.subr.bf16.mxu0 0
        %1361 = vmatpush1.bf16.msra.mxu0 0
        %1362 = vmatprep.subr.bf16.mxu0 0
        %1363 = vmatpush1.bf16.msra.mxu0 0
        %1364 = vmatprep.subr.bf16.mxu0 0
        %1365 = vmatpush1.bf16.msra.mxu0 0
        %1366 = vmatprep.subr.bf16.mxu0 0
        %1367 = vmatpush1.bf16.msra.mxu0 0
        %1368 = vmatprep.subr.bf16.mxu0 0
        %1369 = vmatpush1.bf16.msra.mxu0 0
        %1370 = vmatprep.subr.bf16.mxu0 0
        %1371 = vmatpush1.bf16.msra.mxu0 0
        %1372 = vmatprep.subr.bf16.mxu0 0
        %1373 = vmatpush1.bf16.msra.mxu0 0
        %1374 = vmatprep.subr.bf16.mxu0 0
        %1375 = vmatpush1.bf16.msra.mxu0 0
        %1376 = vmatprep.subr.bf16.mxu0 0
        %1377 = vmatpush1.bf16.msra.mxu0 0
        %1378 = vmatprep.subr.bf16.mxu0 0
        %1379 = vmatpush1.bf16.msra.mxu0 0
        %1380 = vmatprep.subr.bf16.mxu0 0
        %1381 = vmatpush1.bf16.msra.mxu0 0
        %1382 = vmatprep.mubr.bf16.mxu0 0
        %1383 = vmatmul.mubr.bf16.gmra.mrb[0].mxu0 %v1345
        %v1384 = vpop.f32.mrb[0].mxu0
        %v1385 = vadd.f32 0.0, %v1384
        %v1386 = vpop.f32.mrb[0].mxu0
        %v1387 = vpop.f32.mrb[0].mxu0
        %v1388 = vpop.f32.mrb[0].mxu0
        %1389 = vdwg.mxu0
        %1390 = vrot.lane.b32.xlu0 %v714, 104
        %v1391 = vpop.permute.xlu0 %1390
        %1392 = vrot.lane.b32.xlu0 %v714, 72
        %v1393 = vpop.permute.xlu0 %1392
        %v1395 = vsel %vm727, %v1391, 0
        %v1398 = vsel %vm727, %v1393, 0
        %1400 = vmatprep.subr.bf16.mxu0 0
        %1401 = vmatpush1.bf16.xpose.msra.mxu0 %v1398
        %1402 = vmatprep.subr.bf16.mxu0 0
        %1403 = vmatpush1.bf16.xpose.msra.mxu0 0
        %1404 = vmatprep.subr.bf16.mxu0 0
        %1405 = vmatpush1.bf16.xpose.msra.mxu0 0
        %1406 = vmatprep.subr.bf16.mxu0 0
        %1407 = vmatpush1.bf16.xpose.msra.mxu0 0
        %1408 = vmatprep.subr.bf16.mxu0 0
        %1409 = vmatpush1.bf16.xpose.msra.mxu0 0
        %1410 = vmatprep.subr.bf16.mxu0 0
        %1411 = vmatpush1.bf16.xpose.msra.mxu0 0
        %1412 = vmatprep.subr.bf16.mxu0 0
        %1413 = vmatpush1.bf16.xpose.msra.mxu0 0
        %1414 = vmatprep.subr.bf16.mxu0 0
        %1415 = vmatpush1.bf16.xpose.msra.mxu0 0
        %1416 = vmatprep.subr.bf16.mxu0 0
        %1417 = vmatpush1.bf16.xpose.msra.mxu0 0
        %1418 = vmatprep.subr.bf16.mxu0 0
        %1419 = vmatpush1.bf16.xpose.msra.mxu0 0
        %1420 = vmatprep.subr.bf16.mxu0 0
        %1421 = vmatpush1.bf16.xpose.msra.mxu0 0
        %1422 = vmatprep.subr.bf16.mxu0 0
        %1423 = vmatpush1.bf16.xpose.msra.mxu0 0
        %1424 = vmatprep.subr.bf16.mxu0 0
        %1425 = vmatpush1.bf16.xpose.msra.mxu0 0
        %1426 = vmatprep.subr.bf16.mxu0 0
        %1427 = vmatpush1.bf16.xpose.msra.mxu0 0
        %1428 = vmatprep.subr.bf16.mxu0 0
        %1429 = vmatpush1.bf16.xpose.msra.mxu0 0
        %1430 = vmatprep.subr.bf16.mxu0 0
        %1431 = vmatpush1.bf16.xpose.msra.mxu0 0
        %1432 = vmatprep.mubr.bf16.mxu0 0
        %1433 = vmatmul.mubr.bf16.gmra.mrb[0].mxu0 %v1395
        %v1434 = vpop.f32.mrb[0].mxu0
        %v1435 = vadd.f32 %v719, %v1434
        %v1436 = vpop.f32.mrb[0].mxu0
        %v1437 = vpop.f32.mrb[0].mxu0
        %v1438 = vpop.f32.mrb[0].mxu0
        %1439 = vdwg.mxu0
        %1440 = vrot.lane.b32.xlu0 %v715, 104
        %v1441 = vpop.permute.xlu0 %1440
        %1442 = vrot.lane.b32.xlu0 %v715, 72
        %v1443 = vpop.permute.xlu0 %1442
        %v1445 = vsel %vm727, %v1441, 0
        %v1448 = vsel %vm727, %v1443, 0
        %1450 = vmatprep.subr.bf16.mxu0 0
        %1451 = vmatpush1.bf16.xpose.msra.mxu0 %v1448
        %1452 = vmatprep.subr.bf16.mxu0 0
        %1453 = vmatpush1.bf16.xpose.msra.mxu0 0
        %1454 = vmatprep.subr.bf16.mxu0 0
        %1455 = vmatpush1.bf16.xpose.msra.mxu0 0
        %1456 = vmatprep.subr.bf16.mxu0 0
        %1457 = vmatpush1.bf16.xpose.msra.mxu0 0
        %1458 = vmatprep.subr.bf16.mxu0 0
        %1459 = vmatpush1.bf16.xpose.msra.mxu0 0
        %1460 = vmatprep.subr.bf16.mxu0 0
        %1461 = vmatpush1.bf16.xpose.msra.mxu0 0
        %1462 = vmatprep.subr.bf16.mxu0 0
        %1463 = vmatpush1.bf16.xpose.msra.mxu0 0
        %1464 = vmatprep.subr.bf16.mxu0 0
        %1465 = vmatpush1.bf16.xpose.msra.mxu0 0
        %1466 = vmatprep.subr.bf16.mxu0 0
        %1467 = vmatpush1.bf16.xpose.msra.mxu0 0
        %1468 = vmatprep.subr.bf16.mxu0 0
        %1469 = vmatpush1.bf16.xpose.msra.mxu0 0
        %1470 = vmatprep.subr.bf16.mxu0 0
        %1471 = vmatpush1.bf16.xpose.msra.mxu0 0
        %1472 = vmatprep.subr.bf16.mxu0 0
        %1473 = vmatpush1.bf16.xpose.msra.mxu0 0
        %1474 = vmatprep.subr.bf16.mxu0 0
        %1475 = vmatpush1.bf16.xpose.msra.mxu0 0
        %1476 = vmatprep.subr.bf16.mxu0 0
        %1477 = vmatpush1.bf16.xpose.msra.mxu0 0
        %1478 = vmatprep.subr.bf16.mxu0 0
        %1479 = vmatpush1.bf16.xpose.msra.mxu0 0
        %1480 = vmatprep.subr.bf16.mxu0 0
        %1481 = vmatpush1.bf16.xpose.msra.mxu0 0
        %1482 = vmatprep.mubr.bf16.mxu0 0
        %1483 = vmatmul.mubr.bf16.gmra.mrb[0].mxu0 %v1445
        %v1484 = vpop.f32.mrb[0].mxu0
        %v1485 = vadd.f32 %v723, %v1484
        %v1486 = vpop.f32.mrb[0].mxu0
        %v1487 = vpop.f32.mrb[0].mxu0
        %v1488 = vpop.f32.mrb[0].mxu0
        %1489 = vdwg.mxu0
        %v1490 = vsel %vm727, %v1435, -inf
        %1491 = vmax.xlane.f32.xlu0 %v1490
        %v1492 = vpop.xlane.xlu0 %1491
        %v1493 = vsel %vm727, %v1485, -inf
        %1494 = vmax.xlane.f32.xlu0 %v1493
        %v1495 = vpop.xlane.xlu0 %1494
        %v1496 = vsub.f32 %v1435, %v1492
        %v1497 = vsub.f32 %v1485, %v1495
        %v1498 = vmul.f32 %v1496, 1.442695
        %v1499 = vpow.pop %v1498
        %v1500 = vmul.f32 %v1497, 1.442695
        %v1501 = vpow.pop %v1500
        %v1502 = vsel %vm727, %v1499, 0.0
        %1503 = vadd.xlane.f32.xlu0 %v1502
        %v1504 = vpop.xlane.xlu0 %1503
        %v1505 = vsel %vm727, %v1501, 0.0
        %1506 = vadd.xlane.f32.xlu0 %v1505
        %v1507 = vpop.xlane.xlu0 %1506
        %v1508 = vmax.f32 %v1504, 1e-30
        %v1509 = vmax.f32 %v1507, 1e-30
        %v1510 = vrcp.pop %v1508
        %v1511 = vrcp.pop %v1509
        %v1512 = vmul.f32 %v1499, %v1510
        %v1513 = vmul.f32 %v1501, %v1511
        %v1514 = vpack.c.bf16 %v1512, %v1512
        %v1515 = vpack.c.bf16 %v1513, %v1513
        %1516 = vrot.lane.b32.xlu0 %v714, 40
        %v1517 = vpop.permute.xlu0 %1516
        %v1519 = vsel %vm727, %v1514, 0
        %v1522 = vsel %vm854, %v1517, 0
        %1524 = vmatprep.subr.bf16.mxu0 0
        %1525 = vmatpush1.bf16.msra.mxu0 %v1522
        %1526 = vmatprep.subr.bf16.mxu0 0
        %1527 = vmatpush1.bf16.msra.mxu0 0
        %1528 = vmatprep.subr.bf16.mxu0 0
        %1529 = vmatpush1.bf16.msra.mxu0 0
        %1530 = vmatprep.subr.bf16.mxu0 0
        %1531 = vmatpush1.bf16.msra.mxu0 0
        %1532 = vmatprep.subr.bf16.mxu0 0
        %1533 = vmatpush1.bf16.msra.mxu0 0
        %1534 = vmatprep.subr.bf16.mxu0 0
        %1535 = vmatpush1.bf16.msra.mxu0 0
        %1536 = vmatprep.subr.bf16.mxu0 0
        %1537 = vmatpush1.bf16.msra.mxu0 0
        %1538 = vmatprep.subr.bf16.mxu0 0
        %1539 = vmatpush1.bf16.msra.mxu0 0
        %1540 = vmatprep.subr.bf16.mxu0 0
        %1541 = vmatpush1.bf16.msra.mxu0 0
        %1542 = vmatprep.subr.bf16.mxu0 0
        %1543 = vmatpush1.bf16.msra.mxu0 0
        %1544 = vmatprep.subr.bf16.mxu0 0
        %1545 = vmatpush1.bf16.msra.mxu0 0
        %1546 = vmatprep.subr.bf16.mxu0 0
        %1547 = vmatpush1.bf16.msra.mxu0 0
        %1548 = vmatprep.subr.bf16.mxu0 0
        %1549 = vmatpush1.bf16.msra.mxu0 0
        %1550 = vmatprep.subr.bf16.mxu0 0
        %1551 = vmatpush1.bf16.msra.mxu0 0
        %1552 = vmatprep.subr.bf16.mxu0 0
        %1553 = vmatpush1.bf16.msra.mxu0 0
        %1554 = vmatprep.subr.bf16.mxu0 0
        %1555 = vmatpush1.bf16.msra.mxu0 0
        %1556 = vmatprep.mubr.bf16.mxu0 0
        %1557 = vmatmul.mubr.bf16.gmra.mrb[0].mxu0 %v1519
        %v1558 = vpop.f32.mrb[0].mxu0
        %v1559 = vadd.f32 0.0, %v1558
        %v1560 = vpop.f32.mrb[0].mxu0
        %v1561 = vpop.f32.mrb[0].mxu0
        %v1562 = vpop.f32.mrb[0].mxu0
        %1563 = vdwg.mxu0
        %1564 = vrot.lane.b32.xlu0 %v715, 40
        %v1565 = vpop.permute.xlu0 %1564
        %v1567 = vsel %vm727, %v1515, 0
        %v1570 = vsel %vm854, %v1565, 0
        %1572 = vmatprep.subr.bf16.mxu0 0
        %1573 = vmatpush1.bf16.msra.mxu0 %v1570
        %1574 = vmatprep.subr.bf16.mxu0 0
        %1575 = vmatpush1.bf16.msra.mxu0 0
        %1576 = vmatprep.subr.bf16.mxu0 0
        %1577 = vmatpush1.bf16.msra.mxu0 0
        %1578 = vmatprep.subr.bf16.mxu0 0
        %1579 = vmatpush1.bf16.msra.mxu0 0
        %1580 = vmatprep.subr.bf16.mxu0 0
        %1581 = vmatpush1.bf16.msra.mxu0 0
        %1582 = vmatprep.subr.bf16.mxu0 0
        %1583 = vmatpush1.bf16.msra.mxu0 0
        %1584 = vmatprep.subr.bf16.mxu0 0
        %1585 = vmatpush1.bf16.msra.mxu0 0
        %1586 = vmatprep.subr.bf16.mxu0 0
        %1587 = vmatpush1.bf16.msra.mxu0 0
        %1588 = vmatprep.subr.bf16.mxu0 0
        %1589 = vmatpush1.bf16.msra.mxu0 0
        %1590 = vmatprep.subr.bf16.mxu0 0
        %1591 = vmatpush1.bf16.msra.mxu0 0
        %1592 = vmatprep.subr.bf16.mxu0 0
        %1593 = vmatpush1.bf16.msra.mxu0 0
        %1594 = vmatprep.subr.bf16.mxu0 0
        %1595 = vmatpush1.bf16.msra.mxu0 0
        %1596 = vmatprep.subr.bf16.mxu0 0
        %1597 = vmatpush1.bf16.msra.mxu0 0
        %1598 = vmatprep.subr.bf16.mxu0 0
        %1599 = vmatpush1.bf16.msra.mxu0 0
        %1600 = vmatprep.subr.bf16.mxu0 0
        %1601 = vmatpush1.bf16.msra.mxu0 0
        %1602 = vmatprep.subr.bf16.mxu0 0
        %1603 = vmatpush1.bf16.msra.mxu0 0
        %1604 = vmatprep.mubr.bf16.mxu0 0
        %1605 = vmatmul.mubr.bf16.gmra.mrb[0].mxu0 %v1567
        %v1606 = vpop.f32.mrb[0].mxu0
        %v1607 = vadd.f32 0.0, %v1606
        %v1608 = vpop.f32.mrb[0].mxu0
        %v1609 = vpop.f32.mrb[0].mxu0
        %v1610 = vpop.f32.mrb[0].mxu0
        %1611 = vdwg.mxu0
        %1614 = vrot.lane.b32.xlu0 %v1115, 8
        %v1615 = vpop.permute.xlu0 %1614
        %1616 = vrot.lane.b32.xlu0 %v1163, 8
        %v1617 = vpop.permute.xlu0 %1616
        %1622 = vrot.lane.b32.xlu0 %v1337, 16
        %v1623 = vpop.permute.xlu0 %1622
        %1624 = vrot.lane.b32.xlu0 %v1385, 16
        %v1625 = vpop.permute.xlu0 %1624
        %1630 = vrot.lane.b32.xlu0 %v1559, 24
        %v1631 = vpop.permute.xlu0 %1630
        %1632 = vrot.lane.b32.xlu0 %v1607, 24
        %v1633 = vpop.permute.xlu0 %1632
        %v1636 = vsel %vm727, %v893, %v1615
        %v1637 = vsel %vm727, %v941, %v1617
        %vm1638 = vcmask 130048
        %v1639 = vsel %vm1638, %v1636, %v1623
        %v1640 = vsel %vm1638, %v1637, %v1625
        %vm1641 = vcmask 195584
        %v1642 = vsel %vm1641, %v1639, %v1631
        %v1643 = vsel %vm1641, %v1640, %v1633
        %v1644 = vpack.c.bf16 %v1643, %v1642
        %v1645 = vld [vmem:[%s545] sm:$0xf]
        %v1646 = vld [vmem:[%s545 + $0x4] sm:$0xf]
        %v1647 = vld [vmem:[%s545 + $0x8] sm:$0xf]
        %v1648 = vld [vmem:[%s545 + $0xc] sm:$0xf]
        %v1653 = vunpack.c.l.b16 %v1645
        %v1654 = vunpack.c.l.b16 %v1646
        %v1655 = vunpack.c.l.b16 %v1647
        %v1656 = vunpack.c.l.b16 %v1648
        %v1657 = vpack.c.b16 %v1654, %v1653
        %v1658 = vpack.c.b16 %v1656, %v1655
        %v1662 = vsel %vm609, %v1644, 0
        %1664 = vmatprep.subr.bf16.mxu0 0
        %1665 = vmatpush1.bf16.msra.mxu0 %v1657
        %1666 = vmatprep.subr.bf16.mxu0 0
        %1667 = vmatpush1.bf16.msra.mxu0 %v1658
        %1668 = vmatprep.subr.bf16.mxu0 0
        %1669 = vmatpush1.bf16.msra.mxu0 0
        %1670 = vmatprep.subr.bf16.mxu0 0
        %1671 = vmatpush1.bf16.msra.mxu0 0
        %1672 = vmatprep.subr.bf16.mxu0 0
        %1673 = vmatpush1.bf16.msra.mxu0 0
        %1674 = vmatprep.subr.bf16.mxu0 0
        %1675 = vmatpush1.bf16.msra.mxu0 0
        %1676 = vmatprep.subr.bf16.mxu0 0
        %1677 = vmatpush1.bf16.msra.mxu0 0
        %1678 = vmatprep.subr.bf16.mxu0 0
        %1679 = vmatpush1.bf16.msra.mxu0 0
        %1680 = vmatprep.subr.bf16.mxu0 0
        %1681 = vmatpush1.bf16.msra.mxu0 0
        %1682 = vmatprep.subr.bf16.mxu0 0
        %1683 = vmatpush1.bf16.msra.mxu0 0
        %1684 = vmatprep.subr.bf16.mxu0 0
        %1685 = vmatpush1.bf16.msra.mxu0 0
        %1686 = vmatprep.subr.bf16.mxu0 0
        %1687 = vmatpush1.bf16.msra.mxu0 0
        %1688 = vmatprep.subr.bf16.mxu0 0
        %1689 = vmatpush1.bf16.msra.mxu0 0
        %1690 = vmatprep.subr.bf16.mxu0 0
        %1691 = vmatpush1.bf16.msra.mxu0 0
        %1692 = vmatprep.subr.bf16.mxu0 0
        %1693 = vmatpush1.bf16.msra.mxu0 0
        %1694 = vmatprep.subr.bf16.mxu0 0
        %1695 = vmatpush1.bf16.msra.mxu0 0
        %1696 = vmatprep.mubr.bf16.mxu0 0
        %1697 = vmatmul.mubr.bf16.gmra.mrb[0].mxu0 %v1662
        %v1698 = vpop.f32.mrb[0].mxu0
        %v1699 = vadd.f32 0.0, %v1698
        %v1700 = vpop.f32.mrb[0].mxu0
        %v1701 = vpop.f32.mrb[0].mxu0
        %v1702 = vadd.f32 0.0, %v1701
        %v1703 = vpop.f32.mrb[0].mxu0
        %1704 = vdwg.mxu0
        %v1705 = vadd.f32 %v605, %v1699
        %v1706 = vadd.f32 %v606, %v1702
        %v1707 = vld [vmem:[%s548] sm:$0x1]
        %v1708 = vld [vmem:[%s551] sm:$0x1]
        %v1709 = vsel %vm609, %v1705, 0.0
        %1710 = vadd.xlane.f32.xlu0 %v1709
        %v1711 = vpop.xlane.xlu0 %1710
        %v1712 = vsel %vm609, %v1706, 0.0
        %1713 = vadd.xlane.f32.xlu0 %v1712
        %v1714 = vpop.xlane.xlu0 %1713
        %v1715 = vmul.f32 %v1711, %v616
        %v1716 = vmul.f32 %v1714, %v616
        %v1717 = vsub.f32 %v1705, %v1715
        %v1718 = vsub.f32 %v1706, %v1716
        %v1719 = vmul.f32 %v1717, %v1717
        %v1720 = vmul.f32 %v1718, %v1718
        %v1721 = vsel %vm609, %v1719, 0.0
        %1722 = vadd.xlane.f32.xlu0 %v1721
        %v1723 = vpop.xlane.xlu0 %1722
        %v1724 = vsel %vm609, %v1720, 0.0
        %1725 = vadd.xlane.f32.xlu0 %v1724
        %v1726 = vpop.xlane.xlu0 %1725
        %v1727 = vmul.f32 %v1723, %v616
        %v1728 = vmul.f32 %v1726, %v616
        %v1729 = vadd.f32 %v1727, 1e-06
        %v1730 = vadd.f32 %v1728, 1e-06
        %v1731 = vrsqrt.pop %v1729
        %v1732 = vrsqrt.pop %v1730
        %v1733 = vmul.f32 %v1717, %v1731
        %v1734 = vmul.f32 %v1718, %v1732
        %v1736 = vlaneseq
        %v1737 = vshrl.u32 %v1736, 7
        %v1738 = vsub.s32 0, %v1737
        %v1739 = vrot.slane %v1707, %v1738
        %v1741 = vmul.f32 %v1733, %v1739
        %v1742 = vmul.f32 %v1734, %v1739
        %v1744 = vlaneseq
        %v1745 = vshrl.u32 %v1744, 7
        %v1746 = vsub.s32 0, %v1745
        %v1747 = vrot.slane %v1708, %v1746
        %v1749 = vadd.f32 %v1741, %v1747
        %v1750 = vadd.f32 %v1742, %v1747
        %v1751 = vpack.c.bf16 %v1750, %v1749
        %v1752 = vld [vmem:[%s556] sm:$0xf]
        %v1753 = vld [vmem:[%s556 + $0x4] sm:$0xf]
        %v1754 = vld [vmem:[%s556 + $0x8] sm:$0xf]
        %v1755 = vld [vmem:[%s556 + $0xc] sm:$0xf]
        %v1760 = vunpack.c.l.b16 %v1752
        %v1761 = vunpack.c.l.b16 %v1753
        %v1762 = vunpack.c.l.b16 %v1754
        %v1763 = vunpack.c.l.b16 %v1755
        %v1764 = vpack.c.b16 %v1761, %v1760
        %v1765 = vpack.c.b16 %v1763, %v1762
        %v1769 = vsel %vm609, %v1751, 0
        %1771 = vmatprep.subr.bf16.mxu0 0
        %1772 = vmatpush1.bf16.msra.mxu0 %v1764
        %1773 = vmatprep.subr.bf16.mxu0 0
        %1774 = vmatpush1.bf16.msra.mxu0 %v1765
        %1775 = vmatprep.subr.bf16.mxu0 0
        %1776 = vmatpush1.bf16.msra.mxu0 0
        %1777 = vmatprep.subr.bf16.mxu0 0
        %1778 = vmatpush1.bf16.msra.mxu0 0
        %1779 = vmatprep.subr.bf16.mxu0 0
        %1780 = vmatpush1.bf16.msra.mxu0 0
        %1781 = vmatprep.subr.bf16.mxu0 0
        %1782 = vmatpush1.bf16.msra.mxu0 0
        %1783 = vmatprep.subr.bf16.mxu0 0
        %1784 = vmatpush1.bf16.msra.mxu0 0
        %1785 = vmatprep.subr.bf16.mxu0 0
        %1786 = vmatpush1.bf16.msra.mxu0 0
        %1787 = vmatprep.subr.bf16.mxu0 0
        %1788 = vmatpush1.bf16.msra.mxu0 0
        %1789 = vmatprep.subr.bf16.mxu0 0
        %1790 = vmatpush1.bf16.msra.mxu0 0
        %1791 = vmatprep.subr.bf16.mxu0 0
        %1792 = vmatpush1.bf16.msra.mxu0 0
        %1793 = vmatprep.subr.bf16.mxu0 0
        %1794 = vmatpush1.bf16.msra.mxu0 0
        %1795 = vmatprep.subr.bf16.mxu0 0
        %1796 = vmatpush1.bf16.msra.mxu0 0
        %1797 = vmatprep.subr.bf16.mxu0 0
        %1798 = vmatpush1.bf16.msra.mxu0 0
        %1799 = vmatprep.subr.bf16.mxu0 0
        %1800 = vmatpush1.bf16.msra.mxu0 0
        %1801 = vmatprep.subr.bf16.mxu0 0
        %1802 = vmatpush1.bf16.msra.mxu0 0
        %1803 = vmatprep.mubr.bf16.mxu0 0
        %1804 = vmatmul.mubr.bf16.gmra.mrb[0].mxu0 %v1769
        %v1805 = vpop.f32.mrb[0].mxu0
        %v1806 = vadd.f32 0.0, %v1805
        %v1807 = vpop.f32.mrb[0].mxu0
        %v1808 = vpop.f32.mrb[0].mxu0
        %v1809 = vadd.f32 0.0, %v1808
        %v1810 = vpop.f32.mrb[0].mxu0
        %1811 = vdwg.mxu0
        %v1812 = vmax.f32 %v1806, 0.0
        %v1813 = vmax.f32 %v1809, 0.0
        %v1814 = vpack.c.bf16 %v1813, %v1812
        %v1815 = vld [vmem:[%s561] sm:$0xf]
        %v1816 = vld [vmem:[%s561 + $0x4] sm:$0xf]
        %v1817 = vld [vmem:[%s561 + $0x8] sm:$0xf]
        %v1818 = vld [vmem:[%s561 + $0xc] sm:$0xf]
        %v1819 = vld [vmem:[%s561 + $0x10] sm:$0xf]
        %v1820 = vld [vmem:[%s561 + $0x14] sm:$0xf]
        %v1821 = vld [vmem:[%s561 + $0x18] sm:$0xf]
        %v1822 = vld [vmem:[%s561 + $0x1c] sm:$0xf]
        %v1823 = vld [vmem:[%s561 + $0x20] sm:$0xf]
        %v1824 = vld [vmem:[%s561 + $0x24] sm:$0xf]
        %v1825 = vld [vmem:[%s561 + $0x28] sm:$0xf]
        %v1826 = vld [vmem:[%s561 + $0x2c] sm:$0xf]
        %v1827 = vld [vmem:[%s561 + $0x30] sm:$0xf]
        %v1828 = vld [vmem:[%s561 + $0x34] sm:$0xf]
        %v1829 = vld [vmem:[%s561 + $0x38] sm:$0xf]
        %v1830 = vld [vmem:[%s561 + $0x3c] sm:$0xf]
        %v1847 = vunpack.c.l.b16 %v1815
        %v1848 = vunpack.c.l.b16 %v1816
        %v1849 = vunpack.c.l.b16 %v1817
        %v1850 = vunpack.c.l.b16 %v1818
        %v1851 = vunpack.c.l.b16 %v1819
        %v1852 = vunpack.c.l.b16 %v1820
        %v1853 = vunpack.c.l.b16 %v1821
        %v1854 = vunpack.c.l.b16 %v1822
        %v1855 = vunpack.c.l.b16 %v1823
        %v1856 = vunpack.c.l.b16 %v1824
        %v1857 = vunpack.c.l.b16 %v1825
        %v1858 = vunpack.c.l.b16 %v1826
        %v1859 = vunpack.c.l.b16 %v1827
        %v1860 = vunpack.c.l.b16 %v1828
        %v1861 = vunpack.c.l.b16 %v1829
        %v1862 = vunpack.c.l.b16 %v1830
        %v1863 = vpack.c.b16 %v1848, %v1847
        %v1864 = vpack.c.b16 %v1850, %v1849
        %v1865 = vpack.c.b16 %v1852, %v1851
        %v1866 = vpack.c.b16 %v1854, %v1853
        %v1867 = vpack.c.b16 %v1856, %v1855
        %v1868 = vpack.c.b16 %v1858, %v1857
        %v1869 = vpack.c.b16 %v1860, %v1859
        %v1870 = vpack.c.b16 %v1862, %v1861
        %1879 = vmatprep.subr.bf16.mxu0 0
        %1880 = vmatpush1.bf16.msra.mxu0 %v1863
        %1881 = vmatprep.subr.bf16.mxu0 0
        %1882 = vmatpush1.bf16.msra.mxu0 %v1864
        %1883 = vmatprep.subr.bf16.mxu0 0
        %1884 = vmatpush1.bf16.msra.mxu0 %v1865
        %1885 = vmatprep.subr.bf16.mxu0 0
        %1886 = vmatpush1.bf16.msra.mxu0 %v1866
        %1887 = vmatprep.subr.bf16.mxu0 0
        %1888 = vmatpush1.bf16.msra.mxu0 %v1867
        %1889 = vmatprep.subr.bf16.mxu0 0
        %1890 = vmatpush1.bf16.msra.mxu0 %v1868
        %1891 = vmatprep.subr.bf16.mxu0 0
        %1892 = vmatpush1.bf16.msra.mxu0 %v1869
        %1893 = vmatprep.subr.bf16.mxu0 0
        %1894 = vmatpush1.bf16.msra.mxu0 %v1870
        %1895 = vmatprep.subr.bf16.mxu0 0
        %1896 = vmatpush1.bf16.msra.mxu0 0
        %1897 = vmatprep.subr.bf16.mxu0 0
        %1898 = vmatpush1.bf16.msra.mxu0 0
        %1899 = vmatprep.subr.bf16.mxu0 0
        %1900 = vmatpush1.bf16.msra.mxu0 0
        %1901 = vmatprep.subr.bf16.mxu0 0
        %1902 = vmatpush1.bf16.msra.mxu0 0
        %1903 = vmatprep.subr.bf16.mxu0 0
        %1904 = vmatpush1.bf16.msra.mxu0 0
        %1905 = vmatprep.subr.bf16.mxu0 0
        %1906 = vmatpush1.bf16.msra.mxu0 0
        %1907 = vmatprep.subr.bf16.mxu0 0
        %1908 = vmatpush1.bf16.msra.mxu0 0
        %1909 = vmatprep.subr.bf16.mxu0 0
        %1910 = vmatpush1.bf16.msra.mxu0 0
        %1911 = vmatprep.mubr.bf16.mxu0 0
        %1912 = vmatmul.mubr.bf16.gmra.mrb[0].mxu0 %v1814
        %v1913 = vpop.f32.mrb[0].mxu0
        %v1914 = vadd.f32 0.0, %v1913
        %v1915 = vpop.f32.mrb[0].mxu0
        %v1916 = vpop.f32.mrb[0].mxu0
        %v1917 = vadd.f32 0.0, %v1916
        %v1918 = vpop.f32.mrb[0].mxu0
        %1919 = vdwg.mxu0
        %v1920 = vadd.f32 %v1705, %v1914
        %v1921 = vadd.f32 %v1706, %v1917
        %1922 = vst.msk [vmem:[#allocation2] sm:$0xff] %vm609, %v1920
        %1923 = vst.msk [vmem:[#allocation2 + $0x8] sm:$0xff] %vm609, %v1921
        %p1924 = scmp.eq.s32.totalorder %s36, 1
        // Predicated region
        $region73: #{tpu_custom_call.1} parent=67 // pred_check
          %p1925 = pneg %p1924
        $region74: #{tpu_custom_call.1} parent=67 // pred_check_branch
          %1927 = sbr.rel (%p1925) target = $region76
        $region75: #{tpu_custom_call.1} parent=67 // pred_region
          %v1928 = vld [vmem:[%s11] sm:$0x1]
          %v1929 = vld [vmem:[%s12] sm:$0x1]
          %v1930 = vsel %vm609, %v1920, 0.0
          %1931 = vadd.xlane.f32.xlu0 %v1930
          %v1932 = vpop.xlane.xlu0 %1931
          %v1933 = vsel %vm609, %v1921, 0.0
          %1934 = vadd.xlane.f32.xlu0 %v1933
          %v1935 = vpop.xlane.xlu0 %1934
          %v1936 = vmul.f32 %v1932, %v616
          %v1937 = vmul.f32 %v1935, %v616
          %v1938 = vsub.f32 %v1920, %v1936
          %v1939 = vsub.f32 %v1921, %v1937
          %v1940 = vmul.f32 %v1938, %v1938
          %v1941 = vmul.f32 %v1939, %v1939
          %v1942 = vsel %vm609, %v1940, 0.0
          %1943 = vadd.xlane.f32.xlu0 %v1942
          %v1944 = vpop.xlane.xlu0 %1943
          %v1945 = vsel %vm609, %v1941, 0.0
          %1946 = vadd.xlane.f32.xlu0 %v1945
          %v1947 = vpop.xlane.xlu0 %1946
          %v1948 = vmul.f32 %v1944, %v616
          %v1949 = vmul.f32 %v1947, %v616
          %v1950 = vadd.f32 %v1948, 1e-06
          %v1951 = vadd.f32 %v1949, 1e-06
          %v1952 = vrsqrt.pop %v1950
          %v1953 = vrsqrt.pop %v1951
          %v1954 = vmul.f32 %v1938, %v1952
          %v1955 = vmul.f32 %v1939, %v1953
          %v1957 = vlaneseq
          %v1958 = vshrl.u32 %v1957, 7
          %v1959 = vsub.s32 0, %v1958
          %v1960 = vrot.slane %v1928, %v1959
          %v1962 = vmul.f32 %v1954, %v1960
          %v1963 = vmul.f32 %v1955, %v1960
          %v1965 = vlaneseq
          %v1966 = vshrl.u32 %v1965, 7
          %v1967 = vsub.s32 0, %v1966
          %v1968 = vrot.slane %v1929, %v1967
          %v1970 = vadd.f32 %v1962, %v1968
          %v1971 = vadd.f32 %v1963, %v1968
          %1972 = vst.msk [vmem:[#allocation5] sm:$0xff] %vm609, %v1970
          %1973 = vst.msk [vmem:[#allocation5 + $0x8] sm:$0xff] %vm609, %v1971
        $region76: #{tpu_custom_call.1} parent=67 // pred_fallthru
          _
        // Predicated region
        $region77: #{tpu_custom_call.1} parent=67 // pred_check
          %p1974 = pneg %p358
        $region78: #{tpu_custom_call.1} parent=67 // pred_check_branch
          %1976 = sbr.rel (%p1974) target = $region80
        $region79: #{tpu_custom_call.1} parent=67 // pred_region
          %s1977 = smul.u32 2, %s35
          %s1979 = ssub.s32 256, 256
          %1980 = vsyncadd [#allocation6], %s1979
          %s1981 = smul.addr %s1977, 128
          %s1982 = scalar_lea.hbm %s13, %s1981
          %s1983 = sshll.u32 [#allocation5], 4
          %s1984 = int_to_ptr.vmem [resolvable:$true] %s1983
          %1989 = dma.vmem_to_hbm [thread:$0]  %s1984, 256, %s1982, [#allocation6], 128, 128, 8
        $region80: #{tpu_custom_call.1} parent=67 // pred_fallthru
          _
        // Predicated region
        $region81: #{tpu_custom_call.1} parent=67 // pred_check
          %p1990 = pneg %p358
        $region82: #{tpu_custom_call.1} parent=67 // pred_check_branch
          %1992 = sbr.rel (%p1990) target = $region84
        $region83: #{tpu_custom_call.1} parent=67 // pred_region
          %1993 = dma.done [#allocation6], 256
        $region84: #{tpu_custom_call.1} parent=67 // pred_fallthru
          _
      $region68: #{tpu_custom_call.1} parent=5 // pred_fallthru
        _
      %p1994 = scmp.le.s32.totalorder 2, %s26
      // Predicated region
      $region85: #{tpu_custom_call.1} parent=5 // pred_check
        %p1995 = pneg %p1994
      $region86: #{tpu_custom_call.1} parent=5 // pred_check_branch
        %1997 = sbr.rel (%p1995) target = $region88
      $region87: #{tpu_custom_call.1} parent=5 // pred_region
        %s1998 = ssub.s32 %s26, 2
      $region88: #{tpu_custom_call.1} parent=5 // pred_fallthru
        _
    $region6: #{tpu_custom_call.1} parent=1 // loop_footer
      %s30 = sadd.s32 1, %s26
    $region7: #{tpu_custom_call.1} parent=1 // loop_footer_branch
      %25 = sbr.rel target = $region3
    $region8: #{tpu_custom_call.1} parent=1 // loop_exit
      _
    %1999 = vsyncpa [#allocation6], 1
    %s2000 = scalar_lea.sflag [#allocation6], 1
    %2001 = vsyncpa %s2000, 1

</llo_original>
